<compile_context>
chip_gen: v7x
topology: tpu7x:2x2x1
jax: 0.10.0
libtpu: 0.0.40
codegen_flags: <defaults>
</compile_context>

<pallas_src>
import math

import jax
import jax.numpy as jnp
from jax.experimental import pallas as pl
from jax.experimental.pallas import tpu as pltpu

# small, module-consistent sizes
BATCH = 2
SEQ = 8
D_MODEL = 32
D_FF = 64
N_HEADS = 4
D_HEAD = D_MODEL // N_HEADS
D_PAD = 128          # model dim zero-padded to a full 128-lane vreg (lane-dense)
LN_EPS = 1e-5


def _norm(v):
    """Zero-mean / unit-variance over the D_MODEL real features (no affine).

    Inputs have exact zeros in the padded lanes [D_MODEL:D_PAD], so plain sums
    over the full lane-dense vreg divided by D_MODEL give the correct stats.
    Padded lanes come out as -mu*rsqrt(var) garbage, but every consumer either
    multiplies them by zero-padded weight rows or zero-padded gamma/beta.
    """
    inv_d = 1.0 / D_MODEL
    mu = jnp.sum(v, axis=-1, keepdims=True) * inv_d
    ex2 = jnp.sum(v * v, axis=-1, keepdims=True) * inv_d
    var = jnp.maximum(ex2 - mu * mu, 0.0)
    return (v - mu) * jax.lax.rsqrt(var + LN_EPS)


def transformer_layer_kernel(x_ref, wqkv_ref, bqkv_ref, wo_ref, bo_ref,
                             ln_ref, w1_ref, b1_ref, w2_ref, b2_ref, o_ref):
    D, H, dh = D_MODEL, N_HEADS, D_HEAD
    xf = x_ref[...]                                  # (S, D_PAD), one batch element

    # Hoist bias / LN-affine broadcasts exactly once (JAX does not CSE broadcast_in_dim).
    b_qkv = bqkv_ref[...]                            # (1, 3D)   — norm_{q,k,v} beta folded in
    b_o = bo_ref[...]                                # (1, D_PAD)
    b1 = b1_ref[...]                                 # (1, F)    — ff.norm1 beta folded in
    b2 = b2_ref[...]                                 # (1, D_PAD)
    g_out, be_out = ln_ref[0:1, :], ln_ref[1:2, :]   # norm_out affine (zero-padded)
    g_2, be_2 = ln_ref[2:3, :], ln_ref[3:4, :]       # ff.norm2 affine (zero-padded)

    # ---- AttentionLayer: one shared LN, one fused QKV matmul ----
    x_hat = _norm(xf)
    qkv = jnp.dot(x_hat, wqkv_ref[...],
                  preferred_element_type=jnp.float32) + b_qkv            # (S, 3D)

    # Head split into a single head-batched tensor (H, S, dh); 1/sqrt(d_k) is
    # already folded into the Q projection weights.
    def split_heads(base):
        return jnp.stack(
            [qkv[:, base + h * dh: base + (h + 1) * dh] for h in range(H)], axis=0)

    qh, kh, vh = split_heads(0), split_heads(D), split_heads(2 * D)      # (H, S, dh)

    # Head-batched attention: ONE scores einsum, ONE softmax, ONE p@v einsum.
    s = jnp.einsum('hqd,hkd->hqk', qh, kh, preferred_element_type=jnp.float32)
    s = s - jnp.max(s, axis=-1, keepdims=True)
    p = jnp.exp(s)
    # Full-precision reciprocal: approx divide + tanh-GELU would stack against
    # the 2e-3 tolerance (review correctness concern).
    p = p * pl.reciprocal(jnp.sum(p, axis=-1, keepdims=True), approx=False)
    o = jnp.einsum('hqk,hkd->hqd', p, vh, preferred_element_type=jnp.float32)  # (H, S, dh)

    # Single K=32 output projection against the lane-dense (D, D_PAD) W_o.
    o_flat = jnp.concatenate([o[h] for h in range(H)], axis=-1)          # (S, D) head-major
    attn = jnp.dot(o_flat, wo_ref[...],
                   preferred_element_type=jnp.float32) + b_o             # (S, D_PAD)
    attn = _norm(attn) * g_out + be_out                                  # norm_out

    # ---- TransformerLayer residual (dropout = identity) ----
    x1 = xf + attn                                                       # pads stay exactly 0

    # ---- FeedForward (norm1 affine folded into w1; tanh-GELU -> EUP) ----
    h1 = jnp.dot(_norm(x1), w1_ref[...], preferred_element_type=jnp.float32) + b1
    h1 = jax.nn.gelu(h1, approximate=True)
    ff = jnp.dot(h1, w2_ref[...], preferred_element_type=jnp.float32) + b2
    out = _norm(ff + x1) * g_2 + be_2                                    # norm2(out + x)

    o_ref[...] = out.astype(o_ref.dtype)                                 # unmasked 128-lane store


def fuse_params(params):
    """Fold LN affines + score scale into weights/biases and zero-pad to lane-dense shapes."""
    lnw, lnb, qkvo_w, qkvo_b, w1, b1, w2, b2 = params
    scale = 1.0 / math.sqrt(D_HEAD)
    padc = D_PAD - D_MODEL

    def fold(i, s=1.0):
        w_f = qkvo_w[i] * lnw[i][:, None] * s                 # diag(gamma) @ W
        b_f = (lnb[i] @ qkvo_w[i] + qkvo_b[i]) * s            # beta @ W + b
        return w_f, b_f

    wq, bq = fold(0, scale)      # fold 1/sqrt(d_k) into the Q projection
    wk, bk = fold(1)
    wv, bv = fold(2)
    w_qkv = jnp.pad(jnp.concatenate([wq, wk, wv], axis=1), ((0, padc), (0, 0)))   # (D_PAD, 3D)
    b_qkv = jnp.concatenate([bq, bk, bv])[None, :]                                # (1, 3D)
    w_o = jnp.pad(qkvo_w[3], ((0, 0), (0, padc)))                                 # (D, D_PAD)
    b_o = jnp.pad(qkvo_b[3], (0, padc))[None, :]                                  # (1, D_PAD)
    w1_f = jnp.pad(w1 * lnw[4][:, None], ((0, padc), (0, 0)))                     # (D_PAD, F)
    b1_f = (lnb[4] @ w1 + b1[0])[None, :]                                         # (1, F)
    w2_p = jnp.pad(w2, ((0, 0), (0, padc)))                                       # (F, D_PAD)
    b2_p = jnp.pad(b2[0], (0, padc))[None, :]                                     # (1, D_PAD)
    ln_ob = jnp.pad(jnp.stack([lnw[3], lnb[3], lnw[5], lnb[5]]), ((0, 0), (0, padc)))  # (4, D_PAD)
    return w_qkv, b_qkv, w_o, b_o, ln_ob, w1_f, b1_f, w2_p, b2_p


def transformer_layer(x, params):
    B, S, D = x.shape
    M = B * S
    fused = fuse_params(params)
    x_pad = jnp.pad(x.reshape(M, D), ((0, 0), (0, D_PAD - D)))     # lane-dense input

    def full(a):
        n = a.ndim
        return pl.BlockSpec(a.shape, lambda b, _n=n: (0,) * _n)    # grid-invariant full block

    # Advisory cost estimate so XLA schedules the custom call sensibly.
    flops = (2 * M * D_PAD * 3 * D                       # fused QKV matmul
             + 2 * B * N_HEADS * 2 * S * S * D_HEAD      # scores + p@v
             + 2 * M * D * D_PAD                         # output projection
             + 2 * M * D_PAD * D_FF + 2 * M * D_FF * D_PAD)   # feed forward
    transcendentals = B * N_HEADS * S * S + M * D_FF + 8 * M
    bytes_accessed = int((x_pad.size + sum(a.size for a in fused) + M * D_PAD) * 4)

    out_pad = pl.pallas_call(
        transformer_layer_kernel,
        out_shape=jax.ShapeDtypeStruct((M, D_PAD), x.dtype),
        grid=(B,),                                   # one batch element / step; parallel for v7x
        in_specs=[pl.BlockSpec((S, D_PAD), lambda b: (b, 0))] + [full(a) for a in fused],
        out_specs=pl.BlockSpec((S, D_PAD), lambda b: (b, 0)),
        compiler_params=pltpu.CompilerParams(
            dimension_semantics=("parallel",)),
        cost_estimate=pl.CostEstimate(flops=flops,
                                      transcendentals=transcendentals,
                                      bytes_accessed=bytes_accessed),
    )(x_pad, *fused)
    return out_pad[:, :D].reshape(B, S, D)           # crop the zero-padded lanes


def init_params(key):
    """Deterministic parameter init mirroring the module's __init__ shapes."""
    ks = jax.random.split(key, 8)
    gain = 1.0 / math.sqrt(2.0)

    def xavier(k, fan_in, fan_out):
        bound = gain * math.sqrt(6.0 / (fan_in + fan_out))
        # stored as (in, out) so kernel does x @ W
        return jax.random.uniform(k, (fan_in, fan_out), jnp.float32, -bound, bound)

    def lin_bias(k, fan_in, fan_out):
        bound = 1.0 / math.sqrt(fan_in)
        return jax.random.uniform(k, (fan_out,), jnp.float32, -bound, bound)

    # LayerNorm params (PyTorch default gamma=1, beta=0), stacked rows:
    # [norm_q, norm_k, norm_v, norm_out, ff.norm1, ff.norm2]
    lnw = jnp.ones((6, D_MODEL), jnp.float32)
    lnb = jnp.zeros((6, D_MODEL), jnp.float32)

    qkvo_w = jnp.stack([xavier(ks[i], D_MODEL, D_MODEL) for i in range(4)])      # (4, D, D)
    qkvo_b = jnp.stack([lin_bias(jax.random.fold_in(ks[4], i), D_MODEL, D_MODEL)
                        for i in range(4)])                                      # (4, D)
    w1 = xavier(ks[5], D_MODEL, D_FF)                                            # (D, F)
    b1 = lin_bias(ks[6], D_MODEL, D_FF)[None, :]                                 # (1, F)
    w2 = xavier(ks[7], D_FF, D_MODEL)                                            # (F, D)
    b2 = lin_bias(jax.random.fold_in(ks[7], 1), D_FF, D_MODEL)[None, :]          # (1, D)
    return (lnw, lnb, qkvo_w, qkvo_b, w1, b1, w2, b2)


def reference(x, params):
    """Pure-JAX reference of the PyTorch forward (eval mode), unfused params."""
    lnw, lnb, qkvo_w, qkvo_b, w1, b1, w2, b2 = params

    def ln(v, i):
        mu = v.mean(-1, keepdims=True)
        var = ((v - mu) ** 2).mean(-1, keepdims=True)
        return (v - mu) / jnp.sqrt(var + LN_EPS) * lnw[i] + lnb[i]

    B, S, D = x.shape
    dk = D // N_HEADS
    q = ln(x, 0) @ qkvo_w[0] + qkvo_b[0]
    k = ln(x, 1) @ qkvo_w[1] + qkvo_b[1]
    v = ln(x, 2) @ qkvo_w[2] + qkvo_b[2]
    qh = q.reshape(B, S, N_HEADS, dk).transpose(0, 2, 1, 3)
    kh = k.reshape(B, S, N_HEADS, dk).transpose(0, 2, 1, 3)
    vh = v.reshape(B, S, N_HEADS, dk).transpose(0, 2, 1, 3)
    s = jnp.einsum('bhqd,bhkd->bhqk', qh, kh) / math.sqrt(dk)
    p = jax.nn.softmax(s, axis=-1)
    o = jnp.einsum('bhqk,bhkd->bhqd', p, vh).transpose(0, 2, 1, 3).reshape(B, S, D)
    o = ln(o @ qkvo_w[3] + qkvo_b[3], 3)
    x1 = x + o
    h = jax.nn.gelu(ln(x1, 4) @ w1 + b1[0], approximate=False)   # torch.nn.GELU() is exact erf
    return ln(h @ w2 + b2[0] + x1, 5)


if __name__ == "__main__":
    key = jax.random.PRNGKey(0)
    kx, kp = jax.random.split(key)
    x = jax.random.normal(kx, (BATCH, SEQ, D_MODEL), jnp.float32)
    params = init_params(kp)

    out = transformer_layer(x, params)
    out = jax.block_until_ready(out)

    ref = reference(x, params)
    assert out.shape == (BATCH, SEQ, D_MODEL)
    assert jnp.allclose(out, ref, rtol=2e-3, atol=2e-3), \
        f"max abs err {jnp.max(jnp.abs(out - ref))}"
    print("KERNEL_OK")
</pallas_src>

<mosaic_0001>
module attributes {stable_mosaic.version = 11 : i64} {
  func.func @transformer_layer_kernel(%arg0: i32, %arg1: memref<8x128xf32, #tpu.memory_space<vmem>>, %arg2: memref<128x96xf32, #tpu.memory_space<vmem>>, %arg3: memref<1x96xf32, #tpu.memory_space<vmem>>, %arg4: memref<32x128xf32, #tpu.memory_space<vmem>>, %arg5: memref<1x128xf32, #tpu.memory_space<vmem>>, %arg6: memref<4x128xf32, #tpu.memory_space<vmem>>, %arg7: memref<128x64xf32, #tpu.memory_space<vmem>>, %arg8: memref<1x64xf32, #tpu.memory_space<vmem>>, %arg9: memref<64x128xf32, #tpu.memory_space<vmem>>, %arg10: memref<1x128xf32, #tpu.memory_space<vmem>>, %arg11: memref<8x128xf32, #tpu.memory_space<vmem>>) attributes {dimension_semantics = [#tpu.dimension_semantics<parallel>], iteration_bounds = array<i64: 2>, scalar_prefetch = 0 : i64, scratch_operands = 0 : i64, tpu.core_type = #tpu.core_type<tc>, window_params = [{transform_indices = @transform_0, window_bounds = array<i64: 8, 128>}, {pipeline_mode = #tpu.pipeline_mode<synchronous>, transform_indices = @transform_1, window_bounds = array<i64: 128, 96>}, {pipeline_mode = #tpu.pipeline_mode<synchronous>, transform_indices = @transform_2, window_bounds = array<i64: 1, 96>}, {pipeline_mode = #tpu.pipeline_mode<synchronous>, transform_indices = @transform_3, window_bounds = array<i64: 32, 128>}, {pipeline_mode = #tpu.pipeline_mode<synchronous>, transform_indices = @transform_4, window_bounds = array<i64: 1, 128>}, {pipeline_mode = #tpu.pipeline_mode<synchronous>, transform_indices = @transform_5, window_bounds = array<i64: 4, 128>}, {pipeline_mode = #tpu.pipeline_mode<synchronous>, transform_indices = @transform_6, window_bounds = array<i64: 128, 64>}, {pipeline_mode = #tpu.pipeline_mode<synchronous>, transform_indices = @transform_7, window_bounds = array<i64: 1, 64>}, {pipeline_mode = #tpu.pipeline_mode<synchronous>, transform_indices = @transform_8, window_bounds = array<i64: 64, 128>}, {pipeline_mode = #tpu.pipeline_mode<synchronous>, transform_indices = @transform_9, window_bounds = array<i64: 1, 128>}, {transform_indices = @transform_10, window_bounds = array<i64: 8, 128>}]} {
    %c0 = arith.constant 0 : index
    %c0_0 = arith.constant 0 : index
    %0 = vector.load %arg1[%c0, %c0_0] : memref<8x128xf32, #tpu.memory_space<vmem>>, vector<8x128xf32>
    %c0_1 = arith.constant 0 : index
    %c0_2 = arith.constant 0 : index
    %1 = vector.load %arg3[%c0_1, %c0_2] : memref<1x96xf32, #tpu.memory_space<vmem>>, vector<1x96xf32>
    %c0_3 = arith.constant 0 : index
    %c0_4 = arith.constant 0 : index
    %2 = vector.load %arg5[%c0_3, %c0_4] : memref<1x128xf32, #tpu.memory_space<vmem>>, vector<1x128xf32>
    %c0_5 = arith.constant 0 : index
    %c0_6 = arith.constant 0 : index
    %3 = vector.load %arg8[%c0_5, %c0_6] : memref<1x64xf32, #tpu.memory_space<vmem>>, vector<1x64xf32>
    %c0_7 = arith.constant 0 : index
    %c0_8 = arith.constant 0 : index
    %4 = vector.load %arg10[%c0_7, %c0_8] : memref<1x128xf32, #tpu.memory_space<vmem>>, vector<1x128xf32>
    %c0_9 = arith.constant 0 : index
    %c0_10 = arith.constant 0 : index
    %5 = vector.load %arg6[%c0_9, %c0_10] : memref<4x128xf32, #tpu.memory_space<vmem>>, vector<1x128xf32>
    %c1 = arith.constant 1 : index
    %c0_11 = arith.constant 0 : index
    %6 = vector.load %arg6[%c1, %c0_11] : memref<4x128xf32, #tpu.memory_space<vmem>>, vector<1x128xf32>
    %c2 = arith.constant 2 : index
    %c0_12 = arith.constant 0 : index
    %7 = vector.load %arg6[%c2, %c0_12] : memref<4x128xf32, #tpu.memory_space<vmem>>, vector<1x128xf32>
    %c3 = arith.constant 3 : index
    %c0_13 = arith.constant 0 : index
    %8 = vector.load %arg6[%c3, %c0_13] : memref<4x128xf32, #tpu.memory_space<vmem>>, vector<1x128xf32>
    %cst = arith.constant dense<0.000000e+00> : vector<8xf32>
    %9 = vector.multi_reduction <add>, %0, %cst [1] : vector<8x128xf32> to vector<8xf32>
    %10 = vector.shape_cast %9 : vector<8xf32> to vector<8x1xf32>
    %cst_14 = arith.constant 3.125000e-02 : f32
    %11 = vector.broadcast %cst_14 : f32 to vector<8x1xf32>
    %12 = arith.mulf %10, %11 : vector<8x1xf32>
    %13 = arith.mulf %0, %0 : vector<8x128xf32>
    %cst_15 = arith.constant dense<0.000000e+00> : vector<8xf32>
    %14 = vector.multi_reduction <add>, %13, %cst_15 [1] : vector<8x128xf32> to vector<8xf32>
    %15 = vector.shape_cast %14 : vector<8xf32> to vector<8x1xf32>
    %cst_16 = arith.constant 3.125000e-02 : f32
    %16 = vector.broadcast %cst_16 : f32 to vector<8x1xf32>
    %17 = arith.mulf %15, %16 : vector<8x1xf32>
    %18 = arith.mulf %12, %12 : vector<8x1xf32>
    %19 = arith.subf %17, %18 : vector<8x1xf32>
    %cst_17 = arith.constant 0.000000e+00 : f32
    %20 = vector.broadcast %cst_17 : f32 to vector<8x1xf32>
    %21 = arith.maximumf %19, %20 : vector<8x1xf32>
    %22 = vector.broadcast %12 : vector<8x1xf32> to vector<8x128xf32>
    %23 = arith.subf %0, %22 : vector<8x128xf32>
    %cst_18 = arith.constant 9.99999974E-6 : f32
    %24 = vector.broadcast %cst_18 : f32 to vector<8x1xf32>
    %25 = arith.addf %21, %24 : vector<8x1xf32>
    %26 = math.rsqrt %25 : vector<8x1xf32>
    %27 = vector.broadcast %26 : vector<8x1xf32> to vector<8x128xf32>
    %28 = arith.mulf %23, %27 : vector<8x128xf32>
    %c0_19 = arith.constant 0 : index
    %c0_20 = arith.constant 0 : index
    %29 = vector.load %arg2[%c0_19, %c0_20] : memref<128x96xf32, #tpu.memory_space<vmem>>, vector<128x96xf32>
    %cst_21 = arith.constant dense<0.000000e+00> : vector<8x96xf32>
    %30 = tpu.matmul %28, %29, %cst_21 {dimension_numbers = #tpu.dot_dimension_numbers<[1], [0], [0], [1], [0, 0, 1, 1], [], []>} : vector<8x128xf32>, vector<128x96xf32>, vector<8x96xf32> -> vector<8x96xf32>
    %31 = vector.broadcast %1 : vector<1x96xf32> to vector<8x96xf32>
    %32 = arith.addf %30, %31 : vector<8x96xf32>
    %33 = vector.extract_strided_slice %32 {offsets = [0, 0], sizes = [8, 8], strides = [1, 1]} : vector<8x96xf32> to vector<8x8xf32>
    %34 = vector.extract_strided_slice %32 {offsets = [0, 8], sizes = [8, 8], strides = [1, 1]} : vector<8x96xf32> to vector<8x8xf32>
    %35 = vector.extract_strided_slice %32 {offsets = [0, 16], sizes = [8, 8], strides = [1, 1]} : vector<8x96xf32> to vector<8x8xf32>
    %36 = vector.extract_strided_slice %32 {offsets = [0, 24], sizes = [8, 8], strides = [1, 1]} : vector<8x96xf32> to vector<8x8xf32>
    %37 = vector.shape_cast %33 : vector<8x8xf32> to vector<1x8x8xf32>
    %38 = vector.shape_cast %34 : vector<8x8xf32> to vector<1x8x8xf32>
    %39 = vector.shape_cast %35 : vector<8x8xf32> to vector<1x8x8xf32>
    %40 = vector.shape_cast %36 : vector<8x8xf32> to vector<1x8x8xf32>
    %41 = tpu.concatenate %37, %38, %39, %40 in 0 : vector<1x8x8xf32>, vector<1x8x8xf32>, vector<1x8x8xf32>, vector<1x8x8xf32> -> vector<4x8x8xf32>
    %42 = vector.extract_strided_slice %32 {offsets = [0, 32], sizes = [8, 8], strides = [1, 1]} : vector<8x96xf32> to vector<8x8xf32>
    %43 = vector.extract_strided_slice %32 {offsets = [0, 40], sizes = [8, 8], strides = [1, 1]} : vector<8x96xf32> to vector<8x8xf32>
    %44 = vector.extract_strided_slice %32 {offsets = [0, 48], sizes = [8, 8], strides = [1, 1]} : vector<8x96xf32> to vector<8x8xf32>
    %45 = vector.extract_strided_slice %32 {offsets = [0, 56], sizes = [8, 8], strides = [1, 1]} : vector<8x96xf32> to vector<8x8xf32>
    %46 = vector.shape_cast %42 : vector<8x8xf32> to vector<1x8x8xf32>
    %47 = vector.shape_cast %43 : vector<8x8xf32> to vector<1x8x8xf32>
    %48 = vector.shape_cast %44 : vector<8x8xf32> to vector<1x8x8xf32>
    %49 = vector.shape_cast %45 : vector<8x8xf32> to vector<1x8x8xf32>
    %50 = tpu.concatenate %46, %47, %48, %49 in 0 : vector<1x8x8xf32>, vector<1x8x8xf32>, vector<1x8x8xf32>, vector<1x8x8xf32> -> vector<4x8x8xf32>
    %51 = vector.extract_strided_slice %32 {offsets = [0, 64], sizes = [8, 8], strides = [1, 1]} : vector<8x96xf32> to vector<8x8xf32>
    %52 = vector.extract_strided_slice %32 {offsets = [0, 72], sizes = [8, 8], strides = [1, 1]} : vector<8x96xf32> to vector<8x8xf32>
    %53 = vector.extract_strided_slice %32 {offsets = [0, 80], sizes = [8, 8], strides = [1, 1]} : vector<8x96xf32> to vector<8x8xf32>
    %54 = vector.extract_strided_slice %32 {offsets = [0, 88], sizes = [8, 8], strides = [1, 1]} : vector<8x96xf32> to vector<8x8xf32>
    %55 = vector.shape_cast %51 : vector<8x8xf32> to vector<1x8x8xf32>
    %56 = vector.shape_cast %52 : vector<8x8xf32> to vector<1x8x8xf32>
    %57 = vector.shape_cast %53 : vector<8x8xf32> to vector<1x8x8xf32>
    %58 = vector.shape_cast %54 : vector<8x8xf32> to vector<1x8x8xf32>
    %59 = tpu.concatenate %55, %56, %57, %58 in 0 : vector<1x8x8xf32>, vector<1x8x8xf32>, vector<1x8x8xf32>, vector<1x8x8xf32> -> vector<4x8x8xf32>
    "tpu.trace_start"() <{level = 10 : i32, message = "hqd,hkd->hqk"}> : () -> ()
    %cst_22 = arith.constant dense<0.000000e+00> : vector<4x8x8xf32>
    %60 = tpu.matmul %41, %50, %cst_22 {dimension_numbers = #tpu.dot_dimension_numbers<[2], [2], [1], [1], [0, 0, 0, 1, 1, 1], [0], [0]>} : vector<4x8x8xf32>, vector<4x8x8xf32>, vector<4x8x8xf32> -> vector<4x8x8xf32>
    "tpu.trace_stop"() : () -> ()
    %cst_23 = arith.constant dense<0xFF800000> : vector<4x8xf32>
    %61 = vector.multi_reduction <maximumf>, %60, %cst_23 [2] : vector<4x8x8xf32> to vector<4x8xf32>
    %62 = vector.shape_cast %61 : vector<4x8xf32> to vector<4x8x1xf32>
    %63 = vector.broadcast %62 : vector<4x8x1xf32> to vector<4x8x8xf32>
    %64 = arith.subf %60, %63 : vector<4x8x8xf32>
    %65 = math.exp %64 : vector<4x8x8xf32>
    %cst_24 = arith.constant dense<0.000000e+00> : vector<4x8xf32>
    %66 = vector.multi_reduction <add>, %65, %cst_24 [2] : vector<4x8x8xf32> to vector<4x8xf32>
    %67 = vector.shape_cast %66 : vector<4x8xf32> to vector<4x8x1xf32>
    %68 = tpu.reciprocal %67 : vector<4x8x1xf32> -> vector<4x8x1xf32>
    %69 = vector.broadcast %68 : vector<4x8x1xf32> to vector<4x8x8xf32>
    %70 = arith.mulf %65, %69 : vector<4x8x8xf32>
    "tpu.trace_start"() <{level = 10 : i32, message = "hqk,hkd->hqd"}> : () -> ()
    %cst_25 = arith.constant dense<0.000000e+00> : vector<4x8x8xf32>
    %71 = tpu.matmul %70, %59, %cst_25 {dimension_numbers = #tpu.dot_dimension_numbers<[2], [1], [1], [2], [0, 0, 0, 1, 1, 2], [0], [0]>} : vector<4x8x8xf32>, vector<4x8x8xf32>, vector<4x8x8xf32> -> vector<4x8x8xf32>
    "tpu.trace_stop"() : () -> ()
    %72 = vector.extract_strided_slice %71 {offsets = [0, 0, 0], sizes = [1, 8, 8], strides = [1, 1, 1]} : vector<4x8x8xf32> to vector<1x8x8xf32>
    %73 = vector.shape_cast %72 : vector<1x8x8xf32> to vector<8x8xf32>
    %74 = vector.extract_strided_slice %71 {offsets = [1, 0, 0], sizes = [1, 8, 8], strides = [1, 1, 1]} : vector<4x8x8xf32> to vector<1x8x8xf32>
    %75 = vector.shape_cast %74 : vector<1x8x8xf32> to vector<8x8xf32>
    %76 = vector.extract_strided_slice %71 {offsets = [2, 0, 0], sizes = [1, 8, 8], strides = [1, 1, 1]} : vector<4x8x8xf32> to vector<1x8x8xf32>
    %77 = vector.shape_cast %76 : vector<1x8x8xf32> to vector<8x8xf32>
    %78 = vector.extract_strided_slice %71 {offsets = [3, 0, 0], sizes = [1, 8, 8], strides = [1, 1, 1]} : vector<4x8x8xf32> to vector<1x8x8xf32>
    %79 = vector.shape_cast %78 : vector<1x8x8xf32> to vector<8x8xf32>
    %80 = tpu.concatenate %73, %75, %77, %79 in 1 : vector<8x8xf32>, vector<8x8xf32>, vector<8x8xf32>, vector<8x8xf32> -> vector<8x32xf32>
    %c0_26 = arith.constant 0 : index
    %c0_27 = arith.constant 0 : index
    %81 = vector.load %arg4[%c0_26, %c0_27] : memref<32x128xf32, #tpu.memory_space<vmem>>, vector<32x128xf32>
    %cst_28 = arith.constant dense<0.000000e+00> : vector<8x128xf32>
    %82 = tpu.matmul %80, %81, %cst_28 {dimension_numbers = #tpu.dot_dimension_numbers<[1], [0], [0], [1], [0, 0, 1, 1], [], []>} : vector<8x32xf32>, vector<32x128xf32>, vector<8x128xf32> -> vector<8x128xf32>
    %83 = vector.broadcast %2 : vector<1x128xf32> to vector<8x128xf32>
    %84 = arith.addf %82, %83 : vector<8x128xf32>
    %cst_29 = arith.constant dense<0.000000e+00> : vector<8xf32>
    %85 = vector.multi_reduction <add>, %84, %cst_29 [1] : vector<8x128xf32> to vector<8xf32>
    %86 = vector.shape_cast %85 : vector<8xf32> to vector<8x1xf32>
    %cst_30 = arith.constant 3.125000e-02 : f32
    %87 = vector.broadcast %cst_30 : f32 to vector<8x1xf32>
    %88 = arith.mulf %86, %87 : vector<8x1xf32>
    %89 = arith.mulf %84, %84 : vector<8x128xf32>
    %cst_31 = arith.constant dense<0.000000e+00> : vector<8xf32>
    %90 = vector.multi_reduction <add>, %89, %cst_31 [1] : vector<8x128xf32> to vector<8xf32>
    %91 = vector.shape_cast %90 : vector<8xf32> to vector<8x1xf32>
    %cst_32 = arith.constant 3.125000e-02 : f32
    %92 = vector.broadcast %cst_32 : f32 to vector<8x1xf32>
    %93 = arith.mulf %91, %92 : vector<8x1xf32>
    %94 = arith.mulf %88, %88 : vector<8x1xf32>
    %95 = arith.subf %93, %94 : vector<8x1xf32>
    %cst_33 = arith.constant 0.000000e+00 : f32
    %96 = vector.broadcast %cst_33 : f32 to vector<8x1xf32>
    %97 = arith.maximumf %95, %96 : vector<8x1xf32>
    %98 = vector.broadcast %88 : vector<8x1xf32> to vector<8x128xf32>
    %99 = arith.subf %84, %98 : vector<8x128xf32>
    %cst_34 = arith.constant 9.99999974E-6 : f32
    %100 = vector.broadcast %cst_34 : f32 to vector<8x1xf32>
    %101 = arith.addf %97, %100 : vector<8x1xf32>
    %102 = math.rsqrt %101 : vector<8x1xf32>
    %103 = vector.broadcast %102 : vector<8x1xf32> to vector<8x128xf32>
    %104 = arith.mulf %99, %103 : vector<8x128xf32>
    %105 = vector.broadcast %5 : vector<1x128xf32> to vector<8x128xf32>
    %106 = arith.mulf %104, %105 : vector<8x128xf32>
    %107 = vector.broadcast %6 : vector<1x128xf32> to vector<8x128xf32>
    %108 = arith.addf %106, %107 : vector<8x128xf32>
    %109 = arith.addf %0, %108 : vector<8x128xf32>
    %cst_35 = arith.constant dense<0.000000e+00> : vector<8xf32>
    %110 = vector.multi_reduction <add>, %109, %cst_35 [1] : vector<8x128xf32> to vector<8xf32>
    %111 = vector.shape_cast %110 : vector<8xf32> to vector<8x1xf32>
    %cst_36 = arith.constant 3.125000e-02 : f32
    %112 = vector.broadcast %cst_36 : f32 to vector<8x1xf32>
    %113 = arith.mulf %111, %112 : vector<8x1xf32>
    %114 = arith.mulf %109, %109 : vector<8x128xf32>
    %cst_37 = arith.constant dense<0.000000e+00> : vector<8xf32>
    %115 = vector.multi_reduction <add>, %114, %cst_37 [1] : vector<8x128xf32> to vector<8xf32>
    %116 = vector.shape_cast %115 : vector<8xf32> to vector<8x1xf32>
    %cst_38 = arith.constant 3.125000e-02 : f32
    %117 = vector.broadcast %cst_38 : f32 to vector<8x1xf32>
    %118 = arith.mulf %116, %117 : vector<8x1xf32>
    %119 = arith.mulf %113, %113 : vector<8x1xf32>
    %120 = arith.subf %118, %119 : vector<8x1xf32>
    %cst_39 = arith.constant 0.000000e+00 : f32
    %121 = vector.broadcast %cst_39 : f32 to vector<8x1xf32>
    %122 = arith.maximumf %120, %121 : vector<8x1xf32>
    %123 = vector.broadcast %113 : vector<8x1xf32> to vector<8x128xf32>
    %124 = arith.subf %109, %123 : vector<8x128xf32>
    %cst_40 = arith.constant 9.99999974E-6 : f32
    %125 = vector.broadcast %cst_40 : f32 to vector<8x1xf32>
    %126 = arith.addf %122, %125 : vector<8x1xf32>
    %127 = math.rsqrt %126 : vector<8x1xf32>
    %128 = vector.broadcast %127 : vector<8x1xf32> to vector<8x128xf32>
    %129 = arith.mulf %124, %128 : vector<8x128xf32>
    %c0_41 = arith.constant 0 : index
    %c0_42 = arith.constant 0 : index
    %130 = vector.load %arg7[%c0_41, %c0_42] : memref<128x64xf32, #tpu.memory_space<vmem>>, vector<128x64xf32>
    %cst_43 = arith.constant dense<0.000000e+00> : vector<8x64xf32>
    %131 = tpu.matmul %129, %130, %cst_43 {dimension_numbers = #tpu.dot_dimension_numbers<[1], [0], [0], [1], [0, 0, 1, 1], [], []>} : vector<8x128xf32>, vector<128x64xf32>, vector<8x64xf32> -> vector<8x64xf32>
    %132 = vector.broadcast %3 : vector<1x64xf32> to vector<8x64xf32>
    %133 = arith.addf %131, %132 : vector<8x64xf32>
    %134 = arith.mulf %133, %133 : vector<8x64xf32>
    %135 = arith.mulf %133, %134 : vector<8x64xf32>
    %cst_44 = arith.constant 4.471500e-02 : f32
    %136 = vector.broadcast %cst_44 : f32 to vector<8x64xf32>
    %137 = arith.mulf %136, %135 : vector<8x64xf32>
    %138 = arith.addf %133, %137 : vector<8x64xf32>
    %cst_45 = arith.constant 0.797884583 : f32
    %139 = vector.broadcast %cst_45 : f32 to vector<8x64xf32>
    %140 = arith.mulf %139, %138 : vector<8x64xf32>
    %141 = math.tanh %140 : vector<8x64xf32>
    %cst_46 = arith.constant 1.000000e+00 : f32
    %142 = vector.broadcast %cst_46 : f32 to vector<8x64xf32>
    %143 = arith.addf %142, %141 : vector<8x64xf32>
    %cst_47 = arith.constant 5.000000e-01 : f32
    %144 = vector.broadcast %cst_47 : f32 to vector<8x64xf32>
    %145 = arith.mulf %144, %143 : vector<8x64xf32>
    %146 = arith.mulf %133, %145 : vector<8x64xf32>
    %c0_48 = arith.constant 0 : index
    %c0_49 = arith.constant 0 : index
    %147 = vector.load %arg9[%c0_48, %c0_49] : memref<64x128xf32, #tpu.memory_space<vmem>>, vector<64x128xf32>
    %cst_50 = arith.constant dense<0.000000e+00> : vector<8x128xf32>
    %148 = tpu.matmul %146, %147, %cst_50 {dimension_numbers = #tpu.dot_dimension_numbers<[1], [0], [0], [1], [0, 0, 1, 1], [], []>} : vector<8x64xf32>, vector<64x128xf32>, vector<8x128xf32> -> vector<8x128xf32>
    %149 = vector.broadcast %4 : vector<1x128xf32> to vector<8x128xf32>
    %150 = arith.addf %148, %149 : vector<8x128xf32>
    %151 = arith.addf %150, %109 : vector<8x128xf32>
    %cst_51 = arith.constant dense<0.000000e+00> : vector<8xf32>
    %152 = vector.multi_reduction <add>, %151, %cst_51 [1] : vector<8x128xf32> to vector<8xf32>
    %153 = vector.shape_cast %152 : vector<8xf32> to vector<8x1xf32>
    %cst_52 = arith.constant 3.125000e-02 : f32
    %154 = vector.broadcast %cst_52 : f32 to vector<8x1xf32>
    %155 = arith.mulf %153, %154 : vector<8x1xf32>
    %156 = arith.mulf %151, %151 : vector<8x128xf32>
    %cst_53 = arith.constant dense<0.000000e+00> : vector<8xf32>
    %157 = vector.multi_reduction <add>, %156, %cst_53 [1] : vector<8x128xf32> to vector<8xf32>
    %158 = vector.shape_cast %157 : vector<8xf32> to vector<8x1xf32>
    %cst_54 = arith.constant 3.125000e-02 : f32
    %159 = vector.broadcast %cst_54 : f32 to vector<8x1xf32>
    %160 = arith.mulf %158, %159 : vector<8x1xf32>
    %161 = arith.mulf %155, %155 : vector<8x1xf32>
    %162 = arith.subf %160, %161 : vector<8x1xf32>
    %cst_55 = arith.constant 0.000000e+00 : f32
    %163 = vector.broadcast %cst_55 : f32 to vector<8x1xf32>
    %164 = arith.maximumf %162, %163 : vector<8x1xf32>
    %165 = vector.broadcast %155 : vector<8x1xf32> to vector<8x128xf32>
    %166 = arith.subf %151, %165 : vector<8x128xf32>
    %cst_56 = arith.constant 9.99999974E-6 : f32
    %167 = vector.broadcast %cst_56 : f32 to vector<8x1xf32>
    %168 = arith.addf %164, %167 : vector<8x1xf32>
    %169 = math.rsqrt %168 : vector<8x1xf32>
    %170 = vector.broadcast %169 : vector<8x1xf32> to vector<8x128xf32>
    %171 = arith.mulf %166, %170 : vector<8x128xf32>
    %172 = vector.broadcast %7 : vector<1x128xf32> to vector<8x128xf32>
    %173 = arith.mulf %171, %172 : vector<8x128xf32>
    %174 = vector.broadcast %8 : vector<1x128xf32> to vector<8x128xf32>
    %175 = arith.addf %173, %174 : vector<8x128xf32>
    %c0_57 = arith.constant 0 : index
    %c0_58 = arith.constant 0 : index
    %176 = vector.load %arg11[%c0_57, %c0_58] : memref<8x128xf32, #tpu.memory_space<vmem>>, vector<8x128xf32>
    tpu.vector_store %arg11[%c0_57, %c0_58], %175 {strides = array<i32>} : memref<8x128xf32, #tpu.memory_space<vmem>>, vector<8x128xf32>,
    return
  }
  func.func @transform_0(%arg0: i32) -> (i32, i32) {
    %c0_i32 = arith.constant 0 : i32
    %c0_i32_0 = arith.constant 0 : i32
    return %arg0, %c0_i32 : i32, i32
  }
  func.func @transform_1(%arg0: i32) -> (i32, i32) {
    %c0_i32 = arith.constant 0 : i32
    %c0_i32_0 = arith.constant 0 : i32
    %c0_i32_1 = arith.constant 0 : i32
    return %c0_i32, %c0_i32_0 : i32, i32
  }
  func.func @transform_2(%arg0: i32) -> (i32, i32) {
    %c0_i32 = arith.constant 0 : i32
    %c0_i32_0 = arith.constant 0 : i32
    %c0_i32_1 = arith.constant 0 : i32
    return %c0_i32, %c0_i32_0 : i32, i32
  }
  func.func @transform_3(%arg0: i32) -> (i32, i32) {
    %c0_i32 = arith.constant 0 : i32
    %c0_i32_0 = arith.constant 0 : i32
    %c0_i32_1 = arith.constant 0 : i32
    return %c0_i32, %c0_i32_0 : i32, i32
  }
  func.func @transform_4(%arg0: i32) -> (i32, i32) {
    %c0_i32 = arith.constant 0 : i32
    %c0_i32_0 = arith.constant 0 : i32
    %c0_i32_1 = arith.constant 0 : i32
    return %c0_i32, %c0_i32_0 : i32, i32
  }
  func.func @transform_5(%arg0: i32) -> (i32, i32) {
    %c0_i32 = arith.constant 0 : i32
    %c0_i32_0 = arith.constant 0 : i32
    %c0_i32_1 = arith.constant 0 : i32
    return %c0_i32, %c0_i32_0 : i32, i32
  }
  func.func @transform_6(%arg0: i32) -> (i32, i32) {
    %c0_i32 = arith.constant 0 : i32
    %c0_i32_0 = arith.constant 0 : i32
    %c0_i32_1 = arith.constant 0 : i32
    return %c0_i32, %c0_i32_0 : i32, i32
  }
  func.func @transform_7(%arg0: i32) -> (i32, i32) {
    %c0_i32 = arith.constant 0 : i32
    %c0_i32_0 = arith.constant 0 : i32
    %c0_i32_1 = arith.constant 0 : i32
    return %c0_i32, %c0_i32_0 : i32, i32
  }
  func.func @transform_8(%arg0: i32) -> (i32, i32) {
    %c0_i32 = arith.constant 0 : i32
    %c0_i32_0 = arith.constant 0 : i32
    %c0_i32_1 = arith.constant 0 : i32
    return %c0_i32, %c0_i32_0 : i32, i32
  }
  func.func @transform_9(%arg0: i32) -> (i32, i32) {
    %c0_i32 = arith.constant 0 : i32
    %c0_i32_0 = arith.constant 0 : i32
    %c0_i32_1 = arith.constant 0 : i32
    return %c0_i32, %c0_i32_0 : i32, i32
  }
  func.func @transform_10(%arg0: i32) -> (i32, i32) {
    %c0_i32 = arith.constant 0 : i32
    %c0_i32_0 = arith.constant 0 : i32
    return %arg0, %c0_i32 : i32, i32
  }
}

</mosaic_0001>

<llo_original>
// kernel: tpu_custom_call.1
$region0: #{tpu_custom_call.1}
  #allocation0 [shape = 'u32[]', space=smem, size = 0x4, offset = 0x4, fixed_abs, tag = 'smem constant byte address 0x4 - core index']
  #allocation1 [shape = 'u32[144,128]{1,0:T(1,128)}', space=vmem, size = 0x12000, scoped, tag = 'internal scratch']
  %s0 = inlined_call_operand.vmem [shape: f32[16,128], index: 0, kind: input, shape index: {}]
  %s1 = inlined_call_operand.vmem [shape: f32[128,96], index: 1, kind: input, shape index: {}]
  %s2 = inlined_call_operand.vmem [shape: f32[1,96], index: 2, kind: input, shape index: {}]
  %s3 = inlined_call_operand.vmem [shape: f32[32,128], index: 3, kind: input, shape index: {}]
  %s4 = inlined_call_operand.vmem [shape: f32[1,128], index: 4, kind: input, shape index: {}]
  %s5 = inlined_call_operand.vmem [shape: f32[4,128], index: 5, kind: input, shape index: {}]
  %s6 = inlined_call_operand.vmem [shape: f32[128,64], index: 6, kind: input, shape index: {}]
  %s7 = inlined_call_operand.vmem [shape: f32[1,64], index: 7, kind: input, shape index: {}]
  %s8 = inlined_call_operand.vmem [shape: f32[64,128], index: 8, kind: input, shape index: {}]
  %s9 = inlined_call_operand.vmem [shape: f32[1,128], index: 9, kind: input, shape index: {}]
  %s10 = inlined_call_operand.hbm [shape: f32[16,128], index: 10, kind: output, shape index: {}]
  %s11 = sld [smem:[#allocation0]]
  $region73: #{tpu_custom_call.1} parent=0
    _
  %s13 = ssub.s32 1, %s11
  %s14 = scalar_select 0, %s13, %s11
  $region1: #{tpu_custom_call.1} parent=0
    #allocation2 [shape = 'u8[8192]{0}', space=vmem, size = 0x2000, scoped, tag = 'output window, operand 0']
    #allocation3 [shape = 's32[2]{0}', space=sflag, size = 0x8, scoped, tag = 'scoped memory for tpu_custom_call.1']
    %15 = vsyncpa [#allocation3], 0
    %s16 = scalar_lea.sflag [#allocation3], 1
    %17 = vsyncpa %s16, 0
    loop: start=0, step=1, limit=4
    $region2: #{tpu_custom_call.1} parent=1 // loop_pre_header
      _
    $region3: #{tpu_custom_call.1} parent=1 // loop_header
      %s19 = sphi 0, %s23
      %p20 = scmp.ge.s32.totalorder %s19, 4
      %s29 = sphi 0, %s31
      %s32 = sphi 0, %s29
      %s33 = sphi 0, %s32
      %s49 = sphi 0, %s33
      %s53 = sphi 0, %s53
      %s55 = sphi 0, %s53
      %s56 = sphi 0, %s55
      %s70 = sphi 0, %s56
      %s74 = sphi 0, %s74
      %s76 = sphi 0, %s74
      %s77 = sphi 0, %s76
      %s91 = sphi 0, %s77
      %s95 = sphi 0, %s95
      %s97 = sphi 0, %s95
      %s98 = sphi 0, %s97
      %s112 = sphi 0, %s98
      %s116 = sphi 0, %s116
      %s118 = sphi 0, %s116
      %s119 = sphi 0, %s118
      %s133 = sphi 0, %s119
      %s137 = sphi 0, %s137
      %s139 = sphi 0, %s137
      %s140 = sphi 0, %s139
      %s154 = sphi 0, %s140
      %s158 = sphi 0, %s158
      %s160 = sphi 0, %s158
      %s161 = sphi 0, %s160
      %s175 = sphi 0, %s161
      %s179 = sphi 0, %s179
      %s181 = sphi 0, %s179
      %s182 = sphi 0, %s181
      %s196 = sphi 0, %s182
      %s200 = sphi 0, %s200
      %s202 = sphi 0, %s200
      %s203 = sphi 0, %s202
      %s217 = sphi 0, %s203
      %s221 = sphi 0, %s221
      %s223 = sphi 0, %s221
      %s224 = sphi 0, %s223
      %s238 = sphi 0, %s224
      %s244 = sphi 0, %s246
      %s247 = sphi 0, %s244
      %s248 = sphi 0, %s247
      %s264 = sphi 0, %s248
    $region4: #{tpu_custom_call.1} parent=1 // loop_header_branch
      %22 = sbr.rel (%p20) target = $region8
    $region5: #{tpu_custom_call.1} parent=1 // loop_body
      %s24 = ssub.s32 %s19, 1
      %s25 = ssub.s32 %s19, 2
      %s26 = sadd.s32 %s19, 1
      %s27 = ssub.s32 %s19, %s26
      %p28 = scmp.eq.s32.totalorder %s27, 0
      %s30 = sadd.s32 %s29, 1
      %s31 = scalar_select %p28, %s29, %s30
      %p34 = pneg %p28
      %p35 = scmp.eq.s32.totalorder %s19, 1
      %p36 = por %p34, %p35
      %p37 = scmp.ne.s32.totalorder %s29, %s32
      %p38 = scmp.eq.s32.totalorder %s19, 0
      %p39 = por %p37, %p38
      %p40 = scmp.ne.s32.totalorder %s29, %s32
      %p41 = scmp.eq.s32.totalorder %s24, 1
      %p42 = por %p40, %p41
      %p43 = scmp.ne.s32.totalorder %s32, %s33
      %p44 = scmp.eq.s32.totalorder %s24, 0
      %p45 = por %p43, %p44
      %p46 = scmp.ne.s32.totalorder %s32, %s33
      %p47 = scmp.eq.s32.totalorder %s25, 1
      %p48 = por %p46, %p47
      %p50 = scmp.ne.s32.totalorder %s33, %s49
      %p51 = scmp.eq.s32.totalorder %s25, 0
      %p52 = por %p50, %p51
      %s54 = sadd.s32 %s53, 1
      %p57 = scmp.eq.s32.totalorder %s19, 1
      %p58 = scmp.ne.s32.totalorder %s53, %s55
      %p59 = scmp.eq.s32.totalorder %s19, 0
      %p60 = por %p58, %p59
      %p61 = scmp.ne.s32.totalorder %s53, %s55
      %p62 = scmp.eq.s32.totalorder %s24, 1
      %p63 = por %p61, %p62
      %p64 = scmp.ne.s32.totalorder %s55, %s56
      %p65 = scmp.eq.s32.totalorder %s24, 0
      %p66 = por %p64, %p65
      %p67 = scmp.ne.s32.totalorder %s55, %s56
      %p68 = scmp.eq.s32.totalorder %s25, 1
      %p69 = por %p67, %p68
      %p71 = scmp.ne.s32.totalorder %s56, %s70
      %p72 = scmp.eq.s32.totalorder %s25, 0
      %p73 = por %p71, %p72
      %s75 = sadd.s32 %s74, 1
      %p78 = scmp.eq.s32.totalorder %s19, 1
      %p79 = scmp.ne.s32.totalorder %s74, %s76
      %p80 = scmp.eq.s32.totalorder %s19, 0
      %p81 = por %p79, %p80
      %p82 = scmp.ne.s32.totalorder %s74, %s76
      %p83 = scmp.eq.s32.totalorder %s24, 1
      %p84 = por %p82, %p83
      %p85 = scmp.ne.s32.totalorder %s76, %s77
      %p86 = scmp.eq.s32.totalorder %s24, 0
      %p87 = por %p85, %p86
      %p88 = scmp.ne.s32.totalorder %s76, %s77
      %p89 = scmp.eq.s32.totalorder %s25, 1
      %p90 = por %p88, %p89
      %p92 = scmp.ne.s32.totalorder %s77, %s91
      %p93 = scmp.eq.s32.totalorder %s25, 0
      %p94 = por %p92, %p93
      %s96 = sadd.s32 %s95, 1
      %p99 = scmp.eq.s32.totalorder %s19, 1
      %p100 = scmp.ne.s32.totalorder %s95, %s97
      %p101 = scmp.eq.s32.totalorder %s19, 0
      %p102 = por %p100, %p101
      %p103 = scmp.ne.s32.totalorder %s95, %s97
      %p104 = scmp.eq.s32.totalorder %s24, 1
      %p105 = por %p103, %p104
      %p106 = scmp.ne.s32.totalorder %s97, %s98
      %p107 = scmp.eq.s32.totalorder %s24, 0
      %p108 = por %p106, %p107
      %p109 = scmp.ne.s32.totalorder %s97, %s98
      %p110 = scmp.eq.s32.totalorder %s25, 1
      %p111 = por %p109, %p110
      %p113 = scmp.ne.s32.totalorder %s98, %s112
      %p114 = scmp.eq.s32.totalorder %s25, 0
      %p115 = por %p113, %p114
      %s117 = sadd.s32 %s116, 1
      %p120 = scmp.eq.s32.totalorder %s19, 1
      %p121 = scmp.ne.s32.totalorder %s116, %s118
      %p122 = scmp.eq.s32.totalorder %s19, 0
      %p123 = por %p121, %p122
      %p124 = scmp.ne.s32.totalorder %s116, %s118
      %p125 = scmp.eq.s32.totalorder %s24, 1
      %p126 = por %p124, %p125
      %p127 = scmp.ne.s32.totalorder %s118, %s119
      %p128 = scmp.eq.s32.totalorder %s24, 0
      %p129 = por %p127, %p128
      %p130 = scmp.ne.s32.totalorder %s118, %s119
      %p131 = scmp.eq.s32.totalorder %s25, 1
      %p132 = por %p130, %p131
      %p134 = scmp.ne.s32.totalorder %s119, %s133
      %p135 = scmp.eq.s32.totalorder %s25, 0
      %p136 = por %p134, %p135
      %s138 = sadd.s32 %s137, 1
      %p141 = scmp.eq.s32.totalorder %s19, 1
      %p142 = scmp.ne.s32.totalorder %s137, %s139
      %p143 = scmp.eq.s32.totalorder %s19, 0
      %p144 = por %p142, %p143
      %p145 = scmp.ne.s32.totalorder %s137, %s139
      %p146 = scmp.eq.s32.totalorder %s24, 1
      %p147 = por %p145, %p146
      %p148 = scmp.ne.s32.totalorder %s139, %s140
      %p149 = scmp.eq.s32.totalorder %s24, 0
      %p150 = por %p148, %p149
      %p151 = scmp.ne.s32.totalorder %s139, %s140
      %p152 = scmp.eq.s32.totalorder %s25, 1
      %p153 = por %p151, %p152
      %p155 = scmp.ne.s32.totalorder %s140, %s154
      %p156 = scmp.eq.s32.totalorder %s25, 0
      %p157 = por %p155, %p156
      %s159 = sadd.s32 %s158, 1
      %p162 = scmp.eq.s32.totalorder %s19, 1
      %p163 = scmp.ne.s32.totalorder %s158, %s160
      %p164 = scmp.eq.s32.totalorder %s19, 0
      %p165 = por %p163, %p164
      %p166 = scmp.ne.s32.totalorder %s158, %s160
      %p167 = scmp.eq.s32.totalorder %s24, 1
      %p168 = por %p166, %p167
      %p169 = scmp.ne.s32.totalorder %s160, %s161
      %p170 = scmp.eq.s32.totalorder %s24, 0
      %p171 = por %p169, %p170
      %p172 = scmp.ne.s32.totalorder %s160, %s161
      %p173 = scmp.eq.s32.totalorder %s25, 1
      %p174 = por %p172, %p173
      %p176 = scmp.ne.s32.totalorder %s161, %s175
      %p177 = scmp.eq.s32.totalorder %s25, 0
      %p178 = por %p176, %p177
      %s180 = sadd.s32 %s179, 1
      %p183 = scmp.eq.s32.totalorder %s19, 1
      %p184 = scmp.ne.s32.totalorder %s179, %s181
      %p185 = scmp.eq.s32.totalorder %s19, 0
      %p186 = por %p184, %p185
      %p187 = scmp.ne.s32.totalorder %s179, %s181
      %p188 = scmp.eq.s32.totalorder %s24, 1
      %p189 = por %p187, %p188
      %p190 = scmp.ne.s32.totalorder %s181, %s182
      %p191 = scmp.eq.s32.totalorder %s24, 0
      %p192 = por %p190, %p191
      %p193 = scmp.ne.s32.totalorder %s181, %s182
      %p194 = scmp.eq.s32.totalorder %s25, 1
      %p195 = por %p193, %p194
      %p197 = scmp.ne.s32.totalorder %s182, %s196
      %p198 = scmp.eq.s32.totalorder %s25, 0
      %p199 = por %p197, %p198
      %s201 = sadd.s32 %s200, 1
      %p204 = scmp.eq.s32.totalorder %s19, 1
      %p205 = scmp.ne.s32.totalorder %s200, %s202
      %p206 = scmp.eq.s32.totalorder %s19, 0
      %p207 = por %p205, %p206
      %p208 = scmp.ne.s32.totalorder %s200, %s202
      %p209 = scmp.eq.s32.totalorder %s24, 1
      %p210 = por %p208, %p209
      %p211 = scmp.ne.s32.totalorder %s202, %s203
      %p212 = scmp.eq.s32.totalorder %s24, 0
      %p213 = por %p211, %p212
      %p214 = scmp.ne.s32.totalorder %s202, %s203
      %p215 = scmp.eq.s32.totalorder %s25, 1
      %p216 = por %p214, %p215
      %p218 = scmp.ne.s32.totalorder %s203, %s217
      %p219 = scmp.eq.s32.totalorder %s25, 0
      %p220 = por %p218, %p219
      %s222 = sadd.s32 %s221, 1
      %p225 = scmp.eq.s32.totalorder %s19, 1
      %p226 = scmp.ne.s32.totalorder %s221, %s223
      %p227 = scmp.eq.s32.totalorder %s19, 0
      %p228 = por %p226, %p227
      %p229 = scmp.ne.s32.totalorder %s221, %s223
      %p230 = scmp.eq.s32.totalorder %s24, 1
      %p231 = por %p229, %p230
      %p232 = scmp.ne.s32.totalorder %s223, %s224
      %p233 = scmp.eq.s32.totalorder %s24, 0
      %p234 = por %p232, %p233
      %p235 = scmp.ne.s32.totalorder %s223, %s224
      %p236 = scmp.eq.s32.totalorder %s25, 1
      %p237 = por %p235, %p236
      %p239 = scmp.ne.s32.totalorder %s224, %s238
      %p240 = scmp.eq.s32.totalorder %s25, 0
      %p241 = por %p239, %p240
      %s242 = ssub.s32 %s19, %s26
      %p243 = scmp.eq.s32.totalorder %s242, 0
      %s245 = sadd.s32 %s244, 1
      %s246 = scalar_select %p243, %s244, %s245
      %p249 = pneg %p243
      %p250 = scmp.eq.s32.totalorder %s19, 1
      %p251 = por %p249, %p250
      %p252 = scmp.ne.s32.totalorder %s244, %s247
      %p253 = scmp.eq.s32.totalorder %s19, 0
      %p254 = por %p252, %p253
      %p255 = scmp.ne.s32.totalorder %s244, %s247
      %p256 = scmp.eq.s32.totalorder %s24, 1
      %p257 = por %p255, %p256
      %p258 = scmp.ne.s32.totalorder %s247, %s248
      %p259 = scmp.eq.s32.totalorder %s24, 0
      %p260 = por %p258, %p259
      %p261 = scmp.ne.s32.totalorder %s247, %s248
      %p262 = scmp.eq.s32.totalorder %s25, 1
      %p263 = por %p261, %p262
      %p265 = scmp.ne.s32.totalorder %s248, %s264
      %p266 = scmp.eq.s32.totalorder %s25, 0
      %p267 = por %p265, %p266
      %p268 = scmp.le.s32.totalorder 1, %s19
      %p269 = scmp.lt.s32.totalorder %s19, 3
      %p270 = pnand %p268, %p269
      %p271 = pneg %p270
      // Predicated region
      $region9: #{tpu_custom_call.1} parent=5 // pred_check
        _
      $region10: #{tpu_custom_call.1} parent=5 // pred_check_branch
        %273 = sbr.rel (%p270) target = $region12
      $region11: #{tpu_custom_call.1} parent=5 // pred_region
        %s274 = ssub.s32 %s19, 1
        // Predicated region
        $region13: #{tpu_custom_call.1} parent=11 // pred_check
          %p275 = pneg %p66
        $region14: #{tpu_custom_call.1} parent=11 // pred_check_branch
          %277 = sbr.rel (%p275) target = $region16
        $region15: #{tpu_custom_call.1} parent=11 // pred_region
          _
        $region16: #{tpu_custom_call.1} parent=11 // pred_fallthru
          _
        // Predicated region
        $region17: #{tpu_custom_call.1} parent=11 // pred_check
          %p278 = pneg %p87
        $region18: #{tpu_custom_call.1} parent=11 // pred_check_branch
          %280 = sbr.rel (%p278) target = $region20
        $region19: #{tpu_custom_call.1} parent=11 // pred_region
          _
        $region20: #{tpu_custom_call.1} parent=11 // pred_fallthru
          _
        // Predicated region
        $region21: #{tpu_custom_call.1} parent=11 // pred_check
          %p281 = pneg %p108
        $region22: #{tpu_custom_call.1} parent=11 // pred_check_branch
          %283 = sbr.rel (%p281) target = $region24
        $region23: #{tpu_custom_call.1} parent=11 // pred_region
          _
        $region24: #{tpu_custom_call.1} parent=11 // pred_fallthru
          _
        // Predicated region
        $region25: #{tpu_custom_call.1} parent=11 // pred_check
          %p284 = pneg %p129
        $region26: #{tpu_custom_call.1} parent=11 // pred_check_branch
          %286 = sbr.rel (%p284) target = $region28
        $region27: #{tpu_custom_call.1} parent=11 // pred_region
          _
        $region28: #{tpu_custom_call.1} parent=11 // pred_fallthru
          _
        // Predicated region
        $region29: #{tpu_custom_call.1} parent=11 // pred_check
          %p287 = pneg %p150
        $region30: #{tpu_custom_call.1} parent=11 // pred_check_branch
          %289 = sbr.rel (%p287) target = $region32
        $region31: #{tpu_custom_call.1} parent=11 // pred_region
          _
        $region32: #{tpu_custom_call.1} parent=11 // pred_fallthru
          _
        // Predicated region
        $region33: #{tpu_custom_call.1} parent=11 // pred_check
          %p290 = pneg %p171
        $region34: #{tpu_custom_call.1} parent=11 // pred_check_branch
          %292 = sbr.rel (%p290) target = $region36
        $region35: #{tpu_custom_call.1} parent=11 // pred_region
          _
        $region36: #{tpu_custom_call.1} parent=11 // pred_fallthru
          _
        // Predicated region
        $region37: #{tpu_custom_call.1} parent=11 // pred_check
          %p293 = pneg %p192
        $region38: #{tpu_custom_call.1} parent=11 // pred_check_branch
          %295 = sbr.rel (%p293) target = $region40
        $region39: #{tpu_custom_call.1} parent=11 // pred_region
          _
        $region40: #{tpu_custom_call.1} parent=11 // pred_fallthru
          _
        // Predicated region
        $region41: #{tpu_custom_call.1} parent=11 // pred_check
          %p296 = pneg %p213
        $region42: #{tpu_custom_call.1} parent=11 // pred_check_branch
          %298 = sbr.rel (%p296) target = $region44
        $region43: #{tpu_custom_call.1} parent=11 // pred_region
          _
        $region44: #{tpu_custom_call.1} parent=11 // pred_fallthru
          _
        // Predicated region
        $region45: #{tpu_custom_call.1} parent=11 // pred_check
          %p299 = pneg %p234
        $region46: #{tpu_custom_call.1} parent=11 // pred_check_branch
          %301 = sbr.rel (%p299) target = $region48
        $region47: #{tpu_custom_call.1} parent=11 // pred_region
          _
        $region48: #{tpu_custom_call.1} parent=11 // pred_fallthru
          _
      $region12: #{tpu_custom_call.1} parent=5 // pred_fallthru
        _
      %p302 = scmp.lt.s32.totalorder %s19, 2
      // Predicated region
      $region49: #{tpu_custom_call.1} parent=5 // pred_check
        %p303 = pneg %p302
      $region50: #{tpu_custom_call.1} parent=5 // pred_check_branch
        %305 = sbr.rel (%p303) target = $region52
      $region51: #{tpu_custom_call.1} parent=5 // pred_region
        // Predicated region
        $region53: #{tpu_custom_call.1} parent=51 // pred_check
          %p306 = pneg %p39
        $region54: #{tpu_custom_call.1} parent=51 // pred_check_branch
          %308 = sbr.rel (%p306) target = $region56
        $region55: #{tpu_custom_call.1} parent=51 // pred_region
          %p309 = scmp.lt.s32.totalorder %s19, 1
          %s310 = scalar_select %p309, %s19, 1
          %s311 = smul.addr %s310, 8
          %s312 = scalar_lea.vmem %s0, %s311
        $region56: #{tpu_custom_call.1} parent=51 // pred_fallthru
          _
      $region52: #{tpu_custom_call.1} parent=5 // pred_fallthru
        _
      %p313 = scmp.le.s32.totalorder 1, %s19
      %p314 = scmp.lt.s32.totalorder %s19, 3
      %p315 = pnand %p313, %p314
      %p316 = pneg %p315
      // Predicated region
      $region57: #{tpu_custom_call.1} parent=5 // pred_check
        _
      $region58: #{tpu_custom_call.1} parent=5 // pred_check_branch
        %318 = sbr.rel (%p315) target = $region60
      $region59: #{tpu_custom_call.1} parent=5 // pred_region
        %s319 = ssub.s32 %s19, 1
        %p320 = scmp.lt.s32.totalorder %s24, 1
        %s321 = scalar_select %p320, %s24, 1
        %s322 = smul.addr %s321, 8
        %s323 = scalar_lea.vmem %s0, %s322
        %p324 = pneg %p45
        %p325 = pneg %p42
        %p326 = pneg %p66
        %p327 = pneg %p63
        %p328 = pneg %p87
        %p329 = pneg %p84
        %p330 = pneg %p108
        %p331 = pneg %p105
        %p332 = pneg %p129
        %p333 = pneg %p126
        %p334 = pneg %p150
        %p335 = pneg %p147
        %p336 = pneg %p171
        %p337 = pneg %p168
        %p338 = pneg %p192
        %p339 = pneg %p189
        %p340 = pneg %p213
        %p341 = pneg %p210
        %p342 = pneg %p234
        %p343 = pneg %p231
        %p344 = pneg %p260
        %p345 = pneg %p257
        %s346 = sand.u32 %s247, 1
        %s347 = scalar_lea.sflag [#allocation3], %s346
        %s348 = sand.u32 %s247, 1
        %s349 = smul.addr %s348, 8
        %s350 = scalar_lea.vmem [#allocation2], %s349
        %p351 = scmp.lt.s32.totalorder %s24, 1
        %s352 = scalar_select %p351, %s24, 1
        %s353 = smul.addr %s352, 8
        %s354 = scalar_lea.vmem %s0, %s353
        %v355 = vld [vmem:[%s354] sm:$0xff]
        %v356 = vld [vmem:[%s2] sm:$0x1]
        %v357 = vld [vmem:[%s4] sm:$0x1]
        %v358 = vld [vmem:[%s7] sm:$0x1]
        %v359 = vld [vmem:[%s9] sm:$0x1]
        %v360 = vld [vmem:[%s5] sm:$0x1]
        %v361 = vld [vmem:[%s5 + $0x1] sm:$0x1]
        %v362 = vld [vmem:[%s5 + $0x2] sm:$0x1]
        %v363 = vld [vmem:[%s5 + $0x3] sm:$0x1]
        %364 = vadd.xlane.f32.xlu0 %v355
        %v365 = vpop.xlane.xlu0 %364
        %v366 = vmul.f32 %v365, 0.03125
        %v367 = vmul.f32 %v355, %v355
        %368 = vadd.xlane.f32.xlu0 %v367
        %v369 = vpop.xlane.xlu0 %368
        %v370 = vmul.f32 %v369, 0.03125
        %v371 = vmul.f32 %v366, %v366
        %v372 = vsub.f32 %v370, %v371
        %v373 = vmax.f32 %v372, 0.0
        %v374 = vsub.f32 %v355, %v366
        %v375 = vadd.f32 %v373, 1e-05
        %v376 = vrsqrt.pop %v375
        %v377 = vmul.f32 %v374, %v376
        %v378 = vld [vmem:[%s1] sm:$0xff]
        %v379 = vld [vmem:[%s1 + $0x8] sm:$0xff]
        %v380 = vld [vmem:[%s1 + $0x10] sm:$0xff]
        %v381 = vld [vmem:[%s1 + $0x18] sm:$0xff]
        %v382 = vld [vmem:[%s1 + $0x20] sm:$0xff]
        %v383 = vld [vmem:[%s1 + $0x28] sm:$0xff]
        %v384 = vld [vmem:[%s1 + $0x30] sm:$0xff]
        %v385 = vld [vmem:[%s1 + $0x38] sm:$0xff]
        %v386 = vld [vmem:[%s1 + $0x40] sm:$0xff]
        %v387 = vld [vmem:[%s1 + $0x48] sm:$0xff]
        %v388 = vld [vmem:[%s1 + $0x50] sm:$0xff]
        %v389 = vld [vmem:[%s1 + $0x58] sm:$0xff]
        %v390 = vld [vmem:[%s1 + $0x60] sm:$0xff]
        %v391 = vld [vmem:[%s1 + $0x68] sm:$0xff]
        %v392 = vld [vmem:[%s1 + $0x70] sm:$0xff]
        %v393 = vld [vmem:[%s1 + $0x78] sm:$0xff]
        %v395 = vlaneseq
        %v396 = vshrl.u32 %v395, 7
        %v397 = vsub.s32 0, %v396
        %v398 = vrot.slane %v356, %v397
        %400 = vmatprep.subr.mxu0 0.0
        %401 = vmatpush1.msra.mxu0 %v378
        %402 = vmatprep.subr.mxu0 0.0
        %403 = vmatpush1.msra.mxu0 %v379
        %404 = vmatprep.subr.mxu0 0.0
        %405 = vmatpush1.msra.mxu0 %v380
        %406 = vmatprep.subr.mxu0 0.0
        %407 = vmatpush1.msra.mxu0 %v381
        %408 = vmatprep.subr.mxu0 0.0
        %409 = vmatpush1.msra.mxu0 %v382
        %410 = vmatprep.subr.mxu0 0.0
        %411 = vmatpush1.msra.mxu0 %v383
        %412 = vmatprep.subr.mxu0 0.0
        %413 = vmatpush1.msra.mxu0 %v384
        %414 = vmatprep.subr.mxu0 0.0
        %415 = vmatpush1.msra.mxu0 %v385
        %416 = vmatprep.subr.mxu0 0.0
        %417 = vmatpush1.msra.mxu0 %v386
        %418 = vmatprep.subr.mxu0 0.0
        %419 = vmatpush1.msra.mxu0 %v387
        %420 = vmatprep.subr.mxu0 0.0
        %421 = vmatpush1.msra.mxu0 %v388
        %422 = vmatprep.subr.mxu0 0.0
        %423 = vmatpush1.msra.mxu0 %v389
        %424 = vmatprep.subr.mxu0 0.0
        %425 = vmatpush1.msra.mxu0 %v390
        %426 = vmatprep.subr.mxu0 0.0
        %427 = vmatpush1.msra.mxu0 %v391
        %428 = vmatprep.subr.mxu0 0.0
        %429 = vmatpush1.msra.mxu0 %v392
        %430 = vmatprep.subr.mxu0 0.0
        %431 = vmatpush1.msra.mxu0 %v393
        %432 = vmatprep.subr.mxu0 0.0
        %433 = vmatpush1.msra.mxu0 0.0
        %434 = vmatprep.subr.mxu0 0.0
        %435 = vmatpush1.msra.mxu0 0.0
        %436 = vmatprep.subr.mxu0 0.0
        %437 = vmatpush1.msra.mxu0 0.0
        %438 = vmatprep.subr.mxu0 0.0
        %439 = vmatpush1.msra.mxu0 0.0
        %440 = vmatprep.subr.mxu0 0.0
        %441 = vmatpush1.msra.mxu0 0.0
        %442 = vmatprep.subr.mxu0 0.0
        %443 = vmatpush1.msra.mxu0 0.0
        %444 = vmatprep.subr.mxu0 0.0
        %445 = vmatpush1.msra.mxu0 0.0
        %446 = vmatprep.subr.mxu0 0.0
        %447 = vmatpush1.msra.mxu0 0.0
        %448 = vmatprep.subr.mxu0 0.0
        %449 = vmatpush1.msra.mxu0 0.0
        %450 = vmatprep.subr.mxu0 0.0
        %451 = vmatpush1.msra.mxu0 0.0
        %452 = vmatprep.subr.mxu0 0.0
        %453 = vmatpush1.msra.mxu0 0.0
        %454 = vmatprep.subr.mxu0 0.0
        %455 = vmatpush1.msra.mxu0 0.0
        %456 = vmatprep.subr.mxu0 0.0
        %457 = vmatpush1.msra.mxu0 0.0
        %458 = vmatprep.subr.mxu0 0.0
        %459 = vmatpush1.msra.mxu0 0.0
        %460 = vmatprep.subr.mxu0 0.0
        %461 = vmatpush1.msra.mxu0 0.0
        %462 = vmatprep.subr.mxu0 0.0
        %463 = vmatpush1.msra.mxu0 0.0
        %464 = vmatprep.mubr.f32.mxu0 0.0
        %465 = vmatmul.mubr.f32.gmra.mrb[0].mxu0 %v377
        %v466 = vpop.f32.mrb[0].mxu0
        %v467 = vadd.f32 %v398, %v466
        %v468 = vpop.f32.mrb[0].mxu0
        %469 = vdwg.mxu0
        %471 = vrot.lane.b32.xlu0 %v467, 120
        %v472 = vpop.permute.xlu0 %471
        %473 = vrot.lane.b32.xlu0 %v467, 112
        %v474 = vpop.permute.xlu0 %473
        %475 = vrot.lane.b32.xlu0 %v467, 104
        %v476 = vpop.permute.xlu0 %475
        %477 = vrot.lane.b32.xlu0 %v467, 96
        %v478 = vpop.permute.xlu0 %477
        %vm479 = vcmask 64512
        %v480 = vsel %vm479, %v467, 0
        %v482 = vsel %vm479, %v478, 0
        %484 = vmatprep.subr.mxu0 0.0
        %485 = vmatpush1.xpose.msra.mxu0 %v482
        %486 = vmatprep.subr.mxu0 0.0
        %487 = vmatpush1.xpose.msra.mxu0 0.0
        %488 = vmatprep.subr.mxu0 0.0
        %489 = vmatpush1.xpose.msra.mxu0 0.0
        %490 = vmatprep.subr.mxu0 0.0
        %491 = vmatpush1.xpose.msra.mxu0 0.0
        %492 = vmatprep.subr.mxu0 0.0
        %493 = vmatpush1.xpose.msra.mxu0 0.0
        %494 = vmatprep.subr.mxu0 0.0
        %495 = vmatpush1.xpose.msra.mxu0 0.0
        %496 = vmatprep.subr.mxu0 0.0
        %497 = vmatpush1.xpose.msra.mxu0 0.0
        %498 = vmatprep.subr.mxu0 0.0
        %499 = vmatpush1.xpose.msra.mxu0 0.0
        %500 = vmatprep.subr.mxu0 0.0
        %501 = vmatpush1.xpose.msra.mxu0 0.0
        %502 = vmatprep.subr.mxu0 0.0
        %503 = vmatpush1.xpose.msra.mxu0 0.0
        %504 = vmatprep.subr.mxu0 0.0
        %505 = vmatpush1.xpose.msra.mxu0 0.0
        %506 = vmatprep.subr.mxu0 0.0
        %507 = vmatpush1.xpose.msra.mxu0 0.0
        %508 = vmatprep.subr.mxu0 0.0
        %509 = vmatpush1.xpose.msra.mxu0 0.0
        %510 = vmatprep.subr.mxu0 0.0
        %511 = vmatpush1.xpose.msra.mxu0 0.0
        %512 = vmatprep.subr.mxu0 0.0
        %513 = vmatpush1.xpose.msra.mxu0 0.0
        %514 = vmatprep.subr.mxu0 0.0
        %515 = vmatpush1.xpose.msra.mxu0 0.0
        %516 = vmatprep.subr.mxu0 0.0
        %517 = vmatpush1.xpose.msra.mxu0 0.0
        %518 = vmatprep.subr.mxu0 0.0
        %519 = vmatpush1.xpose.msra.mxu0 0.0
        %520 = vmatprep.subr.mxu0 0.0
        %521 = vmatpush1.xpose.msra.mxu0 0.0
        %522 = vmatprep.subr.mxu0 0.0
        %523 = vmatpush1.xpose.msra.mxu0 0.0
        %524 = vmatprep.subr.mxu0 0.0
        %525 = vmatpush1.xpose.msra.mxu0 0.0
        %526 = vmatprep.subr.mxu0 0.0
        %527 = vmatpush1.xpose.msra.mxu0 0.0
        %528 = vmatprep.subr.mxu0 0.0
        %529 = vmatpush1.xpose.msra.mxu0 0.0
        %530 = vmatprep.subr.mxu0 0.0
        %531 = vmatpush1.xpose.msra.mxu0 0.0
        %532 = vmatprep.subr.mxu0 0.0
        %533 = vmatpush1.xpose.msra.mxu0 0.0
        %534 = vmatprep.subr.mxu0 0.0
        %535 = vmatpush1.xpose.msra.mxu0 0.0
        %536 = vmatprep.subr.mxu0 0.0
        %537 = vmatpush1.xpose.msra.mxu0 0.0
        %538 = vmatprep.subr.mxu0 0.0
        %539 = vmatpush1.xpose.msra.mxu0 0.0
        %540 = vmatprep.subr.mxu0 0.0
        %541 = vmatpush1.xpose.msra.mxu0 0.0
        %542 = vmatprep.subr.mxu0 0.0
        %543 = vmatpush1.xpose.msra.mxu0 0.0
        %544 = vmatprep.subr.mxu0 0.0
        %545 = vmatpush1.xpose.msra.mxu0 0.0
        %546 = vmatprep.subr.mxu0 0.0
        %547 = vmatpush1.xpose.msra.mxu0 0.0
        %548 = vmatprep.mubr.f32.mxu0 0.0
        %549 = vmatmul.mubr.f32.gmra.mrb[0].mxu0 %v480
        %v550 = vpop.f32.mrb[0].mxu0
        %v551 = vadd.f32 0.0, %v550
        %v552 = vpop.f32.mrb[0].mxu0
        %553 = vdwg.mxu0
        %554 = vrot.lane.b32.xlu0 %v472, 96
        %v555 = vpop.permute.xlu0 %554
        %v556 = vsel %vm479, %v472, 0
        %v558 = vsel %vm479, %v555, 0
        %560 = vmatprep.subr.mxu0 0.0
        %561 = vmatpush1.xpose.msra.mxu0 %v558
        %562 = vmatprep.subr.mxu0 0.0
        %563 = vmatpush1.xpose.msra.mxu0 0.0
        %564 = vmatprep.subr.mxu0 0.0
        %565 = vmatpush1.xpose.msra.mxu0 0.0
        %566 = vmatprep.subr.mxu0 0.0
        %567 = vmatpush1.xpose.msra.mxu0 0.0
        %568 = vmatprep.subr.mxu0 0.0
        %569 = vmatpush1.xpose.msra.mxu0 0.0
        %570 = vmatprep.subr.mxu0 0.0
        %571 = vmatpush1.xpose.msra.mxu0 0.0
        %572 = vmatprep.subr.mxu0 0.0
        %573 = vmatpush1.xpose.msra.mxu0 0.0
        %574 = vmatprep.subr.mxu0 0.0
        %575 = vmatpush1.xpose.msra.mxu0 0.0
        %576 = vmatprep.subr.mxu0 0.0
        %577 = vmatpush1.xpose.msra.mxu0 0.0
        %578 = vmatprep.subr.mxu0 0.0
        %579 = vmatpush1.xpose.msra.mxu0 0.0
        %580 = vmatprep.subr.mxu0 0.0
        %581 = vmatpush1.xpose.msra.mxu0 0.0
        %582 = vmatprep.subr.mxu0 0.0
        %583 = vmatpush1.xpose.msra.mxu0 0.0
        %584 = vmatprep.subr.mxu0 0.0
        %585 = vmatpush1.xpose.msra.mxu0 0.0
        %586 = vmatprep.subr.mxu0 0.0
        %587 = vmatpush1.xpose.msra.mxu0 0.0
        %588 = vmatprep.subr.mxu0 0.0
        %589 = vmatpush1.xpose.msra.mxu0 0.0
        %590 = vmatprep.subr.mxu0 0.0
        %591 = vmatpush1.xpose.msra.mxu0 0.0
        %592 = vmatprep.subr.mxu0 0.0
        %593 = vmatpush1.xpose.msra.mxu0 0.0
        %594 = vmatprep.subr.mxu0 0.0
        %595 = vmatpush1.xpose.msra.mxu0 0.0
        %596 = vmatprep.subr.mxu0 0.0
        %597 = vmatpush1.xpose.msra.mxu0 0.0
        %598 = vmatprep.subr.mxu0 0.0
        %599 = vmatpush1.xpose.msra.mxu0 0.0
        %600 = vmatprep.subr.mxu0 0.0
        %601 = vmatpush1.xpose.msra.mxu0 0.0
        %602 = vmatprep.subr.mxu0 0.0
        %603 = vmatpush1.xpose.msra.mxu0 0.0
        %604 = vmatprep.subr.mxu0 0.0
        %605 = vmatpush1.xpose.msra.mxu0 0.0
        %606 = vmatprep.subr.mxu0 0.0
        %607 = vmatpush1.xpose.msra.mxu0 0.0
        %608 = vmatprep.subr.mxu0 0.0
        %609 = vmatpush1.xpose.msra.mxu0 0.0
        %610 = vmatprep.subr.mxu0 0.0
        %611 = vmatpush1.xpose.msra.mxu0 0.0
        %612 = vmatprep.subr.mxu0 0.0
        %613 = vmatpush1.xpose.msra.mxu0 0.0
        %614 = vmatprep.subr.mxu0 0.0
        %615 = vmatpush1.xpose.msra.mxu0 0.0
        %616 = vmatprep.subr.mxu0 0.0
        %617 = vmatpush1.xpose.msra.mxu0 0.0
        %618 = vmatprep.subr.mxu0 0.0
        %619 = vmatpush1.xpose.msra.mxu0 0.0
        %620 = vmatprep.subr.mxu0 0.0
        %621 = vmatpush1.xpose.msra.mxu0 0.0
        %622 = vmatprep.subr.mxu0 0.0
        %623 = vmatpush1.xpose.msra.mxu0 0.0
        %624 = vmatprep.mubr.f32.mxu0 0.0
        %625 = vmatmul.mubr.f32.gmra.mrb[0].mxu0 %v556
        %v626 = vpop.f32.mrb[0].mxu0
        %v627 = vadd.f32 0.0, %v626
        %v628 = vpop.f32.mrb[0].mxu0
        %629 = vdwg.mxu0
        %630 = vrot.lane.b32.xlu0 %v474, 96
        %v631 = vpop.permute.xlu0 %630
        %v632 = vsel %vm479, %v474, 0
        %v634 = vsel %vm479, %v631, 0
        %636 = vmatprep.subr.mxu0 0.0
        %637 = vmatpush1.xpose.msra.mxu0 %v634
        %638 = vmatprep.subr.mxu0 0.0
        %639 = vmatpush1.xpose.msra.mxu0 0.0
        %640 = vmatprep.subr.mxu0 0.0
        %641 = vmatpush1.xpose.msra.mxu0 0.0
        %642 = vmatprep.subr.mxu0 0.0
        %643 = vmatpush1.xpose.msra.mxu0 0.0
        %644 = vmatprep.subr.mxu0 0.0
        %645 = vmatpush1.xpose.msra.mxu0 0.0
        %646 = vmatprep.subr.mxu0 0.0
        %647 = vmatpush1.xpose.msra.mxu0 0.0
        %648 = vmatprep.subr.mxu0 0.0
        %649 = vmatpush1.xpose.msra.mxu0 0.0
        %650 = vmatprep.subr.mxu0 0.0
        %651 = vmatpush1.xpose.msra.mxu0 0.0
        %652 = vmatprep.subr.mxu0 0.0
        %653 = vmatpush1.xpose.msra.mxu0 0.0
        %654 = vmatprep.subr.mxu0 0.0
        %655 = vmatpush1.xpose.msra.mxu0 0.0
        %656 = vmatprep.subr.mxu0 0.0
        %657 = vmatpush1.xpose.msra.mxu0 0.0
        %658 = vmatprep.subr.mxu0 0.0
        %659 = vmatpush1.xpose.msra.mxu0 0.0
        %660 = vmatprep.subr.mxu0 0.0
        %661 = vmatpush1.xpose.msra.mxu0 0.0
        %662 = vmatprep.subr.mxu0 0.0
        %663 = vmatpush1.xpose.msra.mxu0 0.0
        %664 = vmatprep.subr.mxu0 0.0
        %665 = vmatpush1.xpose.msra.mxu0 0.0
        %666 = vmatprep.subr.mxu0 0.0
        %667 = vmatpush1.xpose.msra.mxu0 0.0
        %668 = vmatprep.subr.mxu0 0.0
        %669 = vmatpush1.xpose.msra.mxu0 0.0
        %670 = vmatprep.subr.mxu0 0.0
        %671 = vmatpush1.xpose.msra.mxu0 0.0
        %672 = vmatprep.subr.mxu0 0.0
        %673 = vmatpush1.xpose.msra.mxu0 0.0
        %674 = vmatprep.subr.mxu0 0.0
        %675 = vmatpush1.xpose.msra.mxu0 0.0
        %676 = vmatprep.subr.mxu0 0.0
        %677 = vmatpush1.xpose.msra.mxu0 0.0
        %678 = vmatprep.subr.mxu0 0.0
        %679 = vmatpush1.xpose.msra.mxu0 0.0
        %680 = vmatprep.subr.mxu0 0.0
        %681 = vmatpush1.xpose.msra.mxu0 0.0
        %682 = vmatprep.subr.mxu0 0.0
        %683 = vmatpush1.xpose.msra.mxu0 0.0
        %684 = vmatprep.subr.mxu0 0.0
        %685 = vmatpush1.xpose.msra.mxu0 0.0
        %686 = vmatprep.subr.mxu0 0.0
        %687 = vmatpush1.xpose.msra.mxu0 0.0
        %688 = vmatprep.subr.mxu0 0.0
        %689 = vmatpush1.xpose.msra.mxu0 0.0
        %690 = vmatprep.subr.mxu0 0.0
        %691 = vmatpush1.xpose.msra.mxu0 0.0
        %692 = vmatprep.subr.mxu0 0.0
        %693 = vmatpush1.xpose.msra.mxu0 0.0
        %694 = vmatprep.subr.mxu0 0.0
        %695 = vmatpush1.xpose.msra.mxu0 0.0
        %696 = vmatprep.subr.mxu0 0.0
        %697 = vmatpush1.xpose.msra.mxu0 0.0
        %698 = vmatprep.subr.mxu0 0.0
        %699 = vmatpush1.xpose.msra.mxu0 0.0
        %700 = vmatprep.mubr.f32.mxu0 0.0
        %701 = vmatmul.mubr.f32.gmra.mrb[0].mxu0 %v632
        %v702 = vpop.f32.mrb[0].mxu0
        %v703 = vadd.f32 0.0, %v702
        %v704 = vpop.f32.mrb[0].mxu0
        %705 = vdwg.mxu0
        %706 = vrot.lane.b32.xlu0 %v476, 96
        %v707 = vpop.permute.xlu0 %706
        %v708 = vsel %vm479, %v476, 0
        %v710 = vsel %vm479, %v707, 0
        %712 = vmatprep.subr.mxu0 0.0
        %713 = vmatpush1.xpose.msra.mxu0 %v710
        %714 = vmatprep.subr.mxu0 0.0
        %715 = vmatpush1.xpose.msra.mxu0 0.0
        %716 = vmatprep.subr.mxu0 0.0
        %717 = vmatpush1.xpose.msra.mxu0 0.0
        %718 = vmatprep.subr.mxu0 0.0
        %719 = vmatpush1.xpose.msra.mxu0 0.0
        %720 = vmatprep.subr.mxu0 0.0
        %721 = vmatpush1.xpose.msra.mxu0 0.0
        %722 = vmatprep.subr.mxu0 0.0
        %723 = vmatpush1.xpose.msra.mxu0 0.0
        %724 = vmatprep.subr.mxu0 0.0
        %725 = vmatpush1.xpose.msra.mxu0 0.0
        %726 = vmatprep.subr.mxu0 0.0
        %727 = vmatpush1.xpose.msra.mxu0 0.0
        %728 = vmatprep.subr.mxu0 0.0
        %729 = vmatpush1.xpose.msra.mxu0 0.0
        %730 = vmatprep.subr.mxu0 0.0
        %731 = vmatpush1.xpose.msra.mxu0 0.0
        %732 = vmatprep.subr.mxu0 0.0
        %733 = vmatpush1.xpose.msra.mxu0 0.0
        %734 = vmatprep.subr.mxu0 0.0
        %735 = vmatpush1.xpose.msra.mxu0 0.0
        %736 = vmatprep.subr.mxu0 0.0
        %737 = vmatpush1.xpose.msra.mxu0 0.0
        %738 = vmatprep.subr.mxu0 0.0
        %739 = vmatpush1.xpose.msra.mxu0 0.0
        %740 = vmatprep.subr.mxu0 0.0
        %741 = vmatpush1.xpose.msra.mxu0 0.0
        %742 = vmatprep.subr.mxu0 0.0
        %743 = vmatpush1.xpose.msra.mxu0 0.0
        %744 = vmatprep.subr.mxu0 0.0
        %745 = vmatpush1.xpose.msra.mxu0 0.0
        %746 = vmatprep.subr.mxu0 0.0
        %747 = vmatpush1.xpose.msra.mxu0 0.0
        %748 = vmatprep.subr.mxu0 0.0
        %749 = vmatpush1.xpose.msra.mxu0 0.0
        %750 = vmatprep.subr.mxu0 0.0
        %751 = vmatpush1.xpose.msra.mxu0 0.0
        %752 = vmatprep.subr.mxu0 0.0
        %753 = vmatpush1.xpose.msra.mxu0 0.0
        %754 = vmatprep.subr.mxu0 0.0
        %755 = vmatpush1.xpose.msra.mxu0 0.0
        %756 = vmatprep.subr.mxu0 0.0
        %757 = vmatpush1.xpose.msra.mxu0 0.0
        %758 = vmatprep.subr.mxu0 0.0
        %759 = vmatpush1.xpose.msra.mxu0 0.0
        %760 = vmatprep.subr.mxu0 0.0
        %761 = vmatpush1.xpose.msra.mxu0 0.0
        %762 = vmatprep.subr.mxu0 0.0
        %763 = vmatpush1.xpose.msra.mxu0 0.0
        %764 = vmatprep.subr.mxu0 0.0
        %765 = vmatpush1.xpose.msra.mxu0 0.0
        %766 = vmatprep.subr.mxu0 0.0
        %767 = vmatpush1.xpose.msra.mxu0 0.0
        %768 = vmatprep.subr.mxu0 0.0
        %769 = vmatpush1.xpose.msra.mxu0 0.0
        %770 = vmatprep.subr.mxu0 0.0
        %771 = vmatpush1.xpose.msra.mxu0 0.0
        %772 = vmatprep.subr.mxu0 0.0
        %773 = vmatpush1.xpose.msra.mxu0 0.0
        %774 = vmatprep.subr.mxu0 0.0
        %775 = vmatpush1.xpose.msra.mxu0 0.0
        %776 = vmatprep.mubr.f32.mxu0 0.0
        %777 = vmatmul.mubr.f32.gmra.mrb[0].mxu0 %v708
        %v778 = vpop.f32.mrb[0].mxu0
        %v779 = vadd.f32 0.0, %v778
        %v780 = vpop.f32.mrb[0].mxu0
        %781 = vdwg.mxu0
        %v782 = vsel %vm479, %v551, -inf
        %783 = vmax.xlane.f32.xlu0 %v782
        %v784 = vpop.xlane.xlu0 %783
        %v785 = vsel %vm479, %v627, -inf
        %786 = vmax.xlane.f32.xlu0 %v785
        %v787 = vpop.xlane.xlu0 %786
        %v788 = vsel %vm479, %v703, -inf
        %789 = vmax.xlane.f32.xlu0 %v788
        %v790 = vpop.xlane.xlu0 %789
        %v791 = vsel %vm479, %v779, -inf
        %792 = vmax.xlane.f32.xlu0 %v791
        %v793 = vpop.xlane.xlu0 %792
        %v794 = vsub.f32 %v551, %v784
        %v795 = vsub.f32 %v627, %v787
        %v796 = vsub.f32 %v703, %v790
        %v797 = vsub.f32 %v779, %v793
        %v798 = vmul.f32 %v794, 1.442695
        %v799 = vpow.pop %v798
        %v800 = vmul.f32 %v795, 1.442695
        %v801 = vpow.pop %v800
        %v802 = vmul.f32 %v796, 1.442695
        %v803 = vpow.pop %v802
        %v804 = vmul.f32 %v797, 1.442695
        %v805 = vpow.pop %v804
        %v806 = vsel %vm479, %v799, 0.0
        %807 = vadd.xlane.f32.xlu0 %v806
        %v808 = vpop.xlane.xlu0 %807
        %v809 = vsel %vm479, %v801, 0.0
        %810 = vadd.xlane.f32.xlu0 %v809
        %v811 = vpop.xlane.xlu0 %810
        %v812 = vsel %vm479, %v803, 0.0
        %813 = vadd.xlane.f32.xlu0 %v812
        %v814 = vpop.xlane.xlu0 %813
        %v815 = vsel %vm479, %v805, 0.0
        %816 = vadd.xlane.f32.xlu0 %v815
        %v817 = vpop.xlane.xlu0 %816
        %v818 = vrcp.pop %v808
        %v819 = vrcp.pop %v811
        %v820 = vrcp.pop %v814
        %v821 = vrcp.pop %v817
        %v822 = vmul.f32 %v799, %v818
        %v823 = vmul.f32 %v801, %v819
        %v824 = vmul.f32 %v803, %v820
        %v825 = vmul.f32 %v805, %v821
        %826 = vrot.lane.b32.xlu0 %v467, 64
        %v827 = vpop.permute.xlu0 %826
        %v830 = vsel %vm479, %v822, 0
        %832 = vmatprep.subr.mxu0 0.0
        %833 = vmatpush1.msra.mxu0 %v827
        %834 = vmatprep.subr.mxu0 0.0
        %835 = vmatpush1.msra.mxu0 0.0
        %836 = vmatprep.subr.mxu0 0.0
        %837 = vmatpush1.msra.mxu0 0.0
        %838 = vmatprep.subr.mxu0 0.0
        %839 = vmatpush1.msra.mxu0 0.0
        %840 = vmatprep.subr.mxu0 0.0
        %841 = vmatpush1.msra.mxu0 0.0
        %842 = vmatprep.subr.mxu0 0.0
        %843 = vmatpush1.msra.mxu0 0.0
        %844 = vmatprep.subr.mxu0 0.0
        %845 = vmatpush1.msra.mxu0 0.0
        %846 = vmatprep.subr.mxu0 0.0
        %847 = vmatpush1.msra.mxu0 0.0
        %848 = vmatprep.subr.mxu0 0.0
        %849 = vmatpush1.msra.mxu0 0.0
        %850 = vmatprep.subr.mxu0 0.0
        %851 = vmatpush1.msra.mxu0 0.0
        %852 = vmatprep.subr.mxu0 0.0
        %853 = vmatpush1.msra.mxu0 0.0
        %854 = vmatprep.subr.mxu0 0.0
        %855 = vmatpush1.msra.mxu0 0.0
        %856 = vmatprep.subr.mxu0 0.0
        %857 = vmatpush1.msra.mxu0 0.0
        %858 = vmatprep.subr.mxu0 0.0
        %859 = vmatpush1.msra.mxu0 0.0
        %860 = vmatprep.subr.mxu0 0.0
        %861 = vmatpush1.msra.mxu0 0.0
        %862 = vmatprep.subr.mxu0 0.0
        %863 = vmatpush1.msra.mxu0 0.0
        %864 = vmatprep.subr.mxu0 0.0
        %865 = vmatpush1.msra.mxu0 0.0
        %866 = vmatprep.subr.mxu0 0.0
        %867 = vmatpush1.msra.mxu0 0.0
        %868 = vmatprep.subr.mxu0 0.0
        %869 = vmatpush1.msra.mxu0 0.0
        %870 = vmatprep.subr.mxu0 0.0
        %871 = vmatpush1.msra.mxu0 0.0
        %872 = vmatprep.subr.mxu0 0.0
        %873 = vmatpush1.msra.mxu0 0.0
        %874 = vmatprep.subr.mxu0 0.0
        %875 = vmatpush1.msra.mxu0 0.0
        %876 = vmatprep.subr.mxu0 0.0
        %877 = vmatpush1.msra.mxu0 0.0
        %878 = vmatprep.subr.mxu0 0.0
        %879 = vmatpush1.msra.mxu0 0.0
        %880 = vmatprep.subr.mxu0 0.0
        %881 = vmatpush1.msra.mxu0 0.0
        %882 = vmatprep.subr.mxu0 0.0
        %883 = vmatpush1.msra.mxu0 0.0
        %884 = vmatprep.subr.mxu0 0.0
        %885 = vmatpush1.msra.mxu0 0.0
        %886 = vmatprep.subr.mxu0 0.0
        %887 = vmatpush1.msra.mxu0 0.0
        %888 = vmatprep.subr.mxu0 0.0
        %889 = vmatpush1.msra.mxu0 0.0
        %890 = vmatprep.subr.mxu0 0.0
        %891 = vmatpush1.msra.mxu0 0.0
        %892 = vmatprep.subr.mxu0 0.0
        %893 = vmatpush1.msra.mxu0 0.0
        %894 = vmatprep.subr.mxu0 0.0
        %895 = vmatpush1.msra.mxu0 0.0
        %896 = vmatprep.mubr.f32.mxu0 0.0
        %897 = vmatmul.mubr.f32.gmra.mrb[0].mxu0 %v830
        %v898 = vpop.f32.mrb[0].mxu0
        %v899 = vadd.f32 0.0, %v898
        %v900 = vpop.f32.mrb[0].mxu0
        %901 = vdwg.mxu0
        %902 = vrot.lane.b32.xlu0 %v472, 64
        %v903 = vpop.permute.xlu0 %902
        %v906 = vsel %vm479, %v823, 0
        %908 = vmatprep.subr.mxu0 0.0
        %909 = vmatpush1.msra.mxu0 %v903
        %910 = vmatprep.subr.mxu0 0.0
        %911 = vmatpush1.msra.mxu0 0.0
        %912 = vmatprep.subr.mxu0 0.0
        %913 = vmatpush1.msra.mxu0 0.0
        %914 = vmatprep.subr.mxu0 0.0
        %915 = vmatpush1.msra.mxu0 0.0
        %916 = vmatprep.subr.mxu0 0.0
        %917 = vmatpush1.msra.mxu0 0.0
        %918 = vmatprep.subr.mxu0 0.0
        %919 = vmatpush1.msra.mxu0 0.0
        %920 = vmatprep.subr.mxu0 0.0
        %921 = vmatpush1.msra.mxu0 0.0
        %922 = vmatprep.subr.mxu0 0.0
        %923 = vmatpush1.msra.mxu0 0.0
        %924 = vmatprep.subr.mxu0 0.0
        %925 = vmatpush1.msra.mxu0 0.0
        %926 = vmatprep.subr.mxu0 0.0
        %927 = vmatpush1.msra.mxu0 0.0
        %928 = vmatprep.subr.mxu0 0.0
        %929 = vmatpush1.msra.mxu0 0.0
        %930 = vmatprep.subr.mxu0 0.0
        %931 = vmatpush1.msra.mxu0 0.0
        %932 = vmatprep.subr.mxu0 0.0
        %933 = vmatpush1.msra.mxu0 0.0
        %934 = vmatprep.subr.mxu0 0.0
        %935 = vmatpush1.msra.mxu0 0.0
        %936 = vmatprep.subr.mxu0 0.0
        %937 = vmatpush1.msra.mxu0 0.0
        %938 = vmatprep.subr.mxu0 0.0
        %939 = vmatpush1.msra.mxu0 0.0
        %940 = vmatprep.subr.mxu0 0.0
        %941 = vmatpush1.msra.mxu0 0.0
        %942 = vmatprep.subr.mxu0 0.0
        %943 = vmatpush1.msra.mxu0 0.0
        %944 = vmatprep.subr.mxu0 0.0
        %945 = vmatpush1.msra.mxu0 0.0
        %946 = vmatprep.subr.mxu0 0.0
        %947 = vmatpush1.msra.mxu0 0.0
        %948 = vmatprep.subr.mxu0 0.0
        %949 = vmatpush1.msra.mxu0 0.0
        %950 = vmatprep.subr.mxu0 0.0
        %951 = vmatpush1.msra.mxu0 0.0
        %952 = vmatprep.subr.mxu0 0.0
        %953 = vmatpush1.msra.mxu0 0.0
        %954 = vmatprep.subr.mxu0 0.0
        %955 = vmatpush1.msra.mxu0 0.0
        %956 = vmatprep.subr.mxu0 0.0
        %957 = vmatpush1.msra.mxu0 0.0
        %958 = vmatprep.subr.mxu0 0.0
        %959 = vmatpush1.msra.mxu0 0.0
        %960 = vmatprep.subr.mxu0 0.0
        %961 = vmatpush1.msra.mxu0 0.0
        %962 = vmatprep.subr.mxu0 0.0
        %963 = vmatpush1.msra.mxu0 0.0
        %964 = vmatprep.subr.mxu0 0.0
        %965 = vmatpush1.msra.mxu0 0.0
        %966 = vmatprep.subr.mxu0 0.0
        %967 = vmatpush1.msra.mxu0 0.0
        %968 = vmatprep.subr.mxu0 0.0
        %969 = vmatpush1.msra.mxu0 0.0
        %970 = vmatprep.subr.mxu0 0.0
        %971 = vmatpush1.msra.mxu0 0.0
        %972 = vmatprep.mubr.f32.mxu0 0.0
        %973 = vmatmul.mubr.f32.gmra.mrb[0].mxu0 %v906
        %v974 = vpop.f32.mrb[0].mxu0
        %v975 = vadd.f32 0.0, %v974
        %v976 = vpop.f32.mrb[0].mxu0
        %977 = vdwg.mxu0
        %978 = vrot.lane.b32.xlu0 %v474, 64
        %v979 = vpop.permute.xlu0 %978
        %v982 = vsel %vm479, %v824, 0
        %984 = vmatprep.subr.mxu0 0.0
        %985 = vmatpush1.msra.mxu0 %v979
        %986 = vmatprep.subr.mxu0 0.0
        %987 = vmatpush1.msra.mxu0 0.0
        %988 = vmatprep.subr.mxu0 0.0
        %989 = vmatpush1.msra.mxu0 0.0
        %990 = vmatprep.subr.mxu0 0.0
        %991 = vmatpush1.msra.mxu0 0.0
        %992 = vmatprep.subr.mxu0 0.0
        %993 = vmatpush1.msra.mxu0 0.0
        %994 = vmatprep.subr.mxu0 0.0
        %995 = vmatpush1.msra.mxu0 0.0
        %996 = vmatprep.subr.mxu0 0.0
        %997 = vmatpush1.msra.mxu0 0.0
        %998 = vmatprep.subr.mxu0 0.0
        %999 = vmatpush1.msra.mxu0 0.0
        %1000 = vmatprep.subr.mxu0 0.0
        %1001 = vmatpush1.msra.mxu0 0.0
        %1002 = vmatprep.subr.mxu0 0.0
        %1003 = vmatpush1.msra.mxu0 0.0
        %1004 = vmatprep.subr.mxu0 0.0
        %1005 = vmatpush1.msra.mxu0 0.0
        %1006 = vmatprep.subr.mxu0 0.0
        %1007 = vmatpush1.msra.mxu0 0.0
        %1008 = vmatprep.subr.mxu0 0.0
        %1009 = vmatpush1.msra.mxu0 0.0
        %1010 = vmatprep.subr.mxu0 0.0
        %1011 = vmatpush1.msra.mxu0 0.0
        %1012 = vmatprep.subr.mxu0 0.0
        %1013 = vmatpush1.msra.mxu0 0.0
        %1014 = vmatprep.subr.mxu0 0.0
        %1015 = vmatpush1.msra.mxu0 0.0
        %1016 = vmatprep.subr.mxu0 0.0
        %1017 = vmatpush1.msra.mxu0 0.0
        %1018 = vmatprep.subr.mxu0 0.0
        %1019 = vmatpush1.msra.mxu0 0.0
        %1020 = vmatprep.subr.mxu0 0.0
        %1021 = vmatpush1.msra.mxu0 0.0
        %1022 = vmatprep.subr.mxu0 0.0
        %1023 = vmatpush1.msra.mxu0 0.0
        %1024 = vmatprep.subr.mxu0 0.0
        %1025 = vmatpush1.msra.mxu0 0.0
        %1026 = vmatprep.subr.mxu0 0.0
        %1027 = vmatpush1.msra.mxu0 0.0
        %1028 = vmatprep.subr.mxu0 0.0
        %1029 = vmatpush1.msra.mxu0 0.0
        %1030 = vmatprep.subr.mxu0 0.0
        %1031 = vmatpush1.msra.mxu0 0.0
        %1032 = vmatprep.subr.mxu0 0.0
        %1033 = vmatpush1.msra.mxu0 0.0
        %1034 = vmatprep.subr.mxu0 0.0
        %1035 = vmatpush1.msra.mxu0 0.0
        %1036 = vmatprep.subr.mxu0 0.0
        %1037 = vmatpush1.msra.mxu0 0.0
        %1038 = vmatprep.subr.mxu0 0.0
        %1039 = vmatpush1.msra.mxu0 0.0
        %1040 = vmatprep.subr.mxu0 0.0
        %1041 = vmatpush1.msra.mxu0 0.0
        %1042 = vmatprep.subr.mxu0 0.0
        %1043 = vmatpush1.msra.mxu0 0.0
        %1044 = vmatprep.subr.mxu0 0.0
        %1045 = vmatpush1.msra.mxu0 0.0
        %1046 = vmatprep.subr.mxu0 0.0
        %1047 = vmatpush1.msra.mxu0 0.0
        %1048 = vmatprep.mubr.f32.mxu0 0.0
        %1049 = vmatmul.mubr.f32.gmra.mrb[0].mxu0 %v982
        %v1050 = vpop.f32.mrb[0].mxu0
        %v1051 = vadd.f32 0.0, %v1050
        %v1052 = vpop.f32.mrb[0].mxu0
        %1053 = vdwg.mxu0
        %1054 = vrot.lane.b32.xlu0 %v476, 64
        %v1055 = vpop.permute.xlu0 %1054
        %v1058 = vsel %vm479, %v825, 0
        %1060 = vmatprep.subr.mxu0 0.0
        %1061 = vmatpush1.msra.mxu0 %v1055
        %1062 = vmatprep.subr.mxu0 0.0
        %1063 = vmatpush1.msra.mxu0 0.0
        %1064 = vmatprep.subr.mxu0 0.0
        %1065 = vmatpush1.msra.mxu0 0.0
        %1066 = vmatprep.subr.mxu0 0.0
        %1067 = vmatpush1.msra.mxu0 0.0
        %1068 = vmatprep.subr.mxu0 0.0
        %1069 = vmatpush1.msra.mxu0 0.0
        %1070 = vmatprep.subr.mxu0 0.0
        %1071 = vmatpush1.msra.mxu0 0.0
        %1072 = vmatprep.subr.mxu0 0.0
        %1073 = vmatpush1.msra.mxu0 0.0
        %1074 = vmatprep.subr.mxu0 0.0
        %1075 = vmatpush1.msra.mxu0 0.0
        %1076 = vmatprep.subr.mxu0 0.0
        %1077 = vmatpush1.msra.mxu0 0.0
        %1078 = vmatprep.subr.mxu0 0.0
        %1079 = vmatpush1.msra.mxu0 0.0
        %1080 = vmatprep.subr.mxu0 0.0
        %1081 = vmatpush1.msra.mxu0 0.0
        %1082 = vmatprep.subr.mxu0 0.0
        %1083 = vmatpush1.msra.mxu0 0.0
        %1084 = vmatprep.subr.mxu0 0.0
        %1085 = vmatpush1.msra.mxu0 0.0
        %1086 = vmatprep.subr.mxu0 0.0
        %1087 = vmatpush1.msra.mxu0 0.0
        %1088 = vmatprep.subr.mxu0 0.0
        %1089 = vmatpush1.msra.mxu0 0.0
        %1090 = vmatprep.subr.mxu0 0.0
        %1091 = vmatpush1.msra.mxu0 0.0
        %1092 = vmatprep.subr.mxu0 0.0
        %1093 = vmatpush1.msra.mxu0 0.0
        %1094 = vmatprep.subr.mxu0 0.0
        %1095 = vmatpush1.msra.mxu0 0.0
        %1096 = vmatprep.subr.mxu0 0.0
        %1097 = vmatpush1.msra.mxu0 0.0
        %1098 = vmatprep.subr.mxu0 0.0
        %1099 = vmatpush1.msra.mxu0 0.0
        %1100 = vmatprep.subr.mxu0 0.0
        %1101 = vmatpush1.msra.mxu0 0.0
        %1102 = vmatprep.subr.mxu0 0.0
        %1103 = vmatpush1.msra.mxu0 0.0
        %1104 = vmatprep.subr.mxu0 0.0
        %1105 = vmatpush1.msra.mxu0 0.0
        %1106 = vmatprep.subr.mxu0 0.0
        %1107 = vmatpush1.msra.mxu0 0.0
        %1108 = vmatprep.subr.mxu0 0.0
        %1109 = vmatpush1.msra.mxu0 0.0
        %1110 = vmatprep.subr.mxu0 0.0
        %1111 = vmatpush1.msra.mxu0 0.0
        %1112 = vmatprep.subr.mxu0 0.0
        %1113 = vmatpush1.msra.mxu0 0.0
        %1114 = vmatprep.subr.mxu0 0.0
        %1115 = vmatpush1.msra.mxu0 0.0
        %1116 = vmatprep.subr.mxu0 0.0
        %1117 = vmatpush1.msra.mxu0 0.0
        %1118 = vmatprep.subr.mxu0 0.0
        %1119 = vmatpush1.msra.mxu0 0.0
        %1120 = vmatprep.subr.mxu0 0.0
        %1121 = vmatpush1.msra.mxu0 0.0
        %1122 = vmatprep.subr.mxu0 0.0
        %1123 = vmatpush1.msra.mxu0 0.0
        %1124 = vmatprep.mubr.f32.mxu0 0.0
        %1125 = vmatmul.mubr.f32.gmra.mrb[0].mxu0 %v1058
        %v1126 = vpop.f32.mrb[0].mxu0
        %v1127 = vadd.f32 0.0, %v1126
        %v1128 = vpop.f32.mrb[0].mxu0
        %1129 = vdwg.mxu0
        %1131 = vrot.lane.b32.xlu0 %v975, 8
        %v1132 = vpop.permute.xlu0 %1131
        %1135 = vrot.lane.b32.xlu0 %v1051, 16
        %v1136 = vpop.permute.xlu0 %1135
        %1139 = vrot.lane.b32.xlu0 %v1127, 24
        %v1140 = vpop.permute.xlu0 %1139
        %v1142 = vsel %vm479, %v899, %v1132
        %vm1143 = vcmask 130048
        %v1144 = vsel %vm1143, %v1142, %v1136
        %vm1145 = vcmask 195584
        %v1146 = vsel %vm1145, %v1144, %v1140
        %v1147 = vld [vmem:[%s3] sm:$0xff]
        %v1148 = vld [vmem:[%s3 + $0x8] sm:$0xff]
        %v1149 = vld [vmem:[%s3 + $0x10] sm:$0xff]
        %v1150 = vld [vmem:[%s3 + $0x18] sm:$0xff]
        %v1152 = vlaneseq
        %v1153 = vshrl.u32 %v1152, 7
        %v1154 = vsub.s32 0, %v1153
        %v1155 = vrot.slane %v357, %v1154
        %vm1157 = vcmask 261120
        %v1159 = vsel %vm1157, %v1146, 0
        %1161 = vmatprep.subr.mxu0 0.0
        %1162 = vmatpush1.msra.mxu0 %v1147
        %1163 = vmatprep.subr.mxu0 0.0
        %1164 = vmatpush1.msra.mxu0 %v1148
        %1165 = vmatprep.subr.mxu0 0.0
        %1166 = vmatpush1.msra.mxu0 %v1149
        %1167 = vmatprep.subr.mxu0 0.0
        %1168 = vmatpush1.msra.mxu0 %v1150
        %1169 = vmatprep.subr.mxu0 0.0
        %1170 = vmatpush1.msra.mxu0 0.0
        %1171 = vmatprep.subr.mxu0 0.0
        %1172 = vmatpush1.msra.mxu0 0.0
        %1173 = vmatprep.subr.mxu0 0.0
        %1174 = vmatpush1.msra.mxu0 0.0
        %1175 = vmatprep.subr.mxu0 0.0
        %1176 = vmatpush1.msra.mxu0 0.0
        %1177 = vmatprep.subr.mxu0 0.0
        %1178 = vmatpush1.msra.mxu0 0.0
        %1179 = vmatprep.subr.mxu0 0.0
        %1180 = vmatpush1.msra.mxu0 0.0
        %1181 = vmatprep.subr.mxu0 0.0
        %1182 = vmatpush1.msra.mxu0 0.0
        %1183 = vmatprep.subr.mxu0 0.0
        %1184 = vmatpush1.msra.mxu0 0.0
        %1185 = vmatprep.subr.mxu0 0.0
        %1186 = vmatpush1.msra.mxu0 0.0
        %1187 = vmatprep.subr.mxu0 0.0
        %1188 = vmatpush1.msra.mxu0 0.0
        %1189 = vmatprep.subr.mxu0 0.0
        %1190 = vmatpush1.msra.mxu0 0.0
        %1191 = vmatprep.subr.mxu0 0.0
        %1192 = vmatpush1.msra.mxu0 0.0
        %1193 = vmatprep.subr.mxu0 0.0
        %1194 = vmatpush1.msra.mxu0 0.0
        %1195 = vmatprep.subr.mxu0 0.0
        %1196 = vmatpush1.msra.mxu0 0.0
        %1197 = vmatprep.subr.mxu0 0.0
        %1198 = vmatpush1.msra.mxu0 0.0
        %1199 = vmatprep.subr.mxu0 0.0
        %1200 = vmatpush1.msra.mxu0 0.0
        %1201 = vmatprep.subr.mxu0 0.0
        %1202 = vmatpush1.msra.mxu0 0.0
        %1203 = vmatprep.subr.mxu0 0.0
        %1204 = vmatpush1.msra.mxu0 0.0
        %1205 = vmatprep.subr.mxu0 0.0
        %1206 = vmatpush1.msra.mxu0 0.0
        %1207 = vmatprep.subr.mxu0 0.0
        %1208 = vmatpush1.msra.mxu0 0.0
        %1209 = vmatprep.subr.mxu0 0.0
        %1210 = vmatpush1.msra.mxu0 0.0
        %1211 = vmatprep.subr.mxu0 0.0
        %1212 = vmatpush1.msra.mxu0 0.0
        %1213 = vmatprep.subr.mxu0 0.0
        %1214 = vmatpush1.msra.mxu0 0.0
        %1215 = vmatprep.subr.mxu0 0.0
        %1216 = vmatpush1.msra.mxu0 0.0
        %1217 = vmatprep.subr.mxu0 0.0
        %1218 = vmatpush1.msra.mxu0 0.0
        %1219 = vmatprep.subr.mxu0 0.0
        %1220 = vmatpush1.msra.mxu0 0.0
        %1221 = vmatprep.subr.mxu0 0.0
        %1222 = vmatpush1.msra.mxu0 0.0
        %1223 = vmatprep.subr.mxu0 0.0
        %1224 = vmatpush1.msra.mxu0 0.0
        %1225 = vmatprep.mubr.f32.mxu0 0.0
        %1226 = vmatmul.mubr.f32.gmra.mrb[0].mxu0 %v1159
        %v1227 = vpop.f32.mrb[0].mxu0
        %v1228 = vadd.f32 %v1155, %v1227
        %v1229 = vpop.f32.mrb[0].mxu0
        %1230 = vdwg.mxu0
        %1231 = vadd.xlane.f32.xlu0 %v1228
        %v1232 = vpop.xlane.xlu0 %1231
        %v1233 = vmul.f32 %v1232, 0.03125
        %v1234 = vmul.f32 %v1228, %v1228
        %1235 = vadd.xlane.f32.xlu0 %v1234
        %v1236 = vpop.xlane.xlu0 %1235
        %v1237 = vmul.f32 %v1236, 0.03125
        %v1238 = vmul.f32 %v1233, %v1233
        %v1239 = vsub.f32 %v1237, %v1238
        %v1240 = vmax.f32 %v1239, 0.0
        %v1241 = vsub.f32 %v1228, %v1233
        %v1242 = vadd.f32 %v1240, 1e-05
        %v1243 = vrsqrt.pop %v1242
        %v1244 = vmul.f32 %v1241, %v1243
        %v1245 = vlaneseq
        %v1246 = vshrl.u32 %v1245, 7
        %v1247 = vsub.s32 0, %v1246
        %v1248 = vrot.slane %v360, %v1247
        %v1249 = vmul.f32 %v1244, %v1248
        %v1250 = vlaneseq
        %v1251 = vshrl.u32 %v1250, 7
        %v1252 = vsub.s32 0, %v1251
        %v1253 = vrot.slane %v361, %v1252
        %v1254 = vadd.f32 %v1249, %v1253
        %v1255 = vadd.f32 %v355, %v1254
        %1256 = vadd.xlane.f32.xlu0 %v1255
        %v1257 = vpop.xlane.xlu0 %1256
        %v1258 = vmul.f32 %v1257, 0.03125
        %v1259 = vmul.f32 %v1255, %v1255
        %1260 = vadd.xlane.f32.xlu0 %v1259
        %v1261 = vpop.xlane.xlu0 %1260
        %v1262 = vmul.f32 %v1261, 0.03125
        %v1263 = vmul.f32 %v1258, %v1258
        %v1264 = vsub.f32 %v1262, %v1263
        %v1265 = vmax.f32 %v1264, 0.0
        %v1266 = vsub.f32 %v1255, %v1258
        %v1267 = vadd.f32 %v1265, 1e-05
        %v1268 = vrsqrt.pop %v1267
        %v1269 = vmul.f32 %v1266, %v1268
        %v1270 = vld [vmem:[%s6] sm:$0xff]
        %v1271 = vld [vmem:[%s6 + $0x8] sm:$0xff]
        %v1272 = vld [vmem:[%s6 + $0x10] sm:$0xff]
        %v1273 = vld [vmem:[%s6 + $0x18] sm:$0xff]
        %v1274 = vld [vmem:[%s6 + $0x20] sm:$0xff]
        %v1275 = vld [vmem:[%s6 + $0x28] sm:$0xff]
        %v1276 = vld [vmem:[%s6 + $0x30] sm:$0xff]
        %v1277 = vld [vmem:[%s6 + $0x38] sm:$0xff]
        %v1278 = vld [vmem:[%s6 + $0x40] sm:$0xff]
        %v1279 = vld [vmem:[%s6 + $0x48] sm:$0xff]
        %v1280 = vld [vmem:[%s6 + $0x50] sm:$0xff]
        %v1281 = vld [vmem:[%s6 + $0x58] sm:$0xff]
        %v1282 = vld [vmem:[%s6 + $0x60] sm:$0xff]
        %v1283 = vld [vmem:[%s6 + $0x68] sm:$0xff]
        %v1284 = vld [vmem:[%s6 + $0x70] sm:$0xff]
        %v1285 = vld [vmem:[%s6 + $0x78] sm:$0xff]
        %v1287 = vlaneseq
        %v1288 = vshrl.u32 %v1287, 7
        %v1289 = vsub.s32 0, %v1288
        %v1290 = vrot.slane %v358, %v1289
        %1292 = vmatprep.subr.mxu0 0.0
        %1293 = vmatpush1.msra.mxu0 %v1270
        %1294 = vmatprep.subr.mxu0 0.0
        %1295 = vmatpush1.msra.mxu0 %v1271
        %1296 = vmatprep.subr.mxu0 0.0
        %1297 = vmatpush1.msra.mxu0 %v1272
        %1298 = vmatprep.subr.mxu0 0.0
        %1299 = vmatpush1.msra.mxu0 %v1273
        %1300 = vmatprep.subr.mxu0 0.0
        %1301 = vmatpush1.msra.mxu0 %v1274
        %1302 = vmatprep.subr.mxu0 0.0
        %1303 = vmatpush1.msra.mxu0 %v1275
        %1304 = vmatprep.subr.mxu0 0.0
        %1305 = vmatpush1.msra.mxu0 %v1276
        %1306 = vmatprep.subr.mxu0 0.0
        %1307 = vmatpush1.msra.mxu0 %v1277
        %1308 = vmatprep.subr.mxu0 0.0
        %1309 = vmatpush1.msra.mxu0 %v1278
        %1310 = vmatprep.subr.mxu0 0.0
        %1311 = vmatpush1.msra.mxu0 %v1279
        %1312 = vmatprep.subr.mxu0 0.0
        %1313 = vmatpush1.msra.mxu0 %v1280
        %1314 = vmatprep.subr.mxu0 0.0
        %1315 = vmatpush1.msra.mxu0 %v1281
        %1316 = vmatprep.subr.mxu0 0.0
        %1317 = vmatpush1.msra.mxu0 %v1282
        %1318 = vmatprep.subr.mxu0 0.0
        %1319 = vmatpush1.msra.mxu0 %v1283
        %1320 = vmatprep.subr.mxu0 0.0
        %1321 = vmatpush1.msra.mxu0 %v1284
        %1322 = vmatprep.subr.mxu0 0.0
        %1323 = vmatpush1.msra.mxu0 %v1285
        %1324 = vmatprep.subr.mxu0 0.0
        %1325 = vmatpush1.msra.mxu0 0.0
        %1326 = vmatprep.subr.mxu0 0.0
        %1327 = vmatpush1.msra.mxu0 0.0
        %1328 = vmatprep.subr.mxu0 0.0
        %1329 = vmatpush1.msra.mxu0 0.0
        %1330 = vmatprep.subr.mxu0 0.0
        %1331 = vmatpush1.msra.mxu0 0.0
        %1332 = vmatprep.subr.mxu0 0.0
        %1333 = vmatpush1.msra.mxu0 0.0
        %1334 = vmatprep.subr.mxu0 0.0
        %1335 = vmatpush1.msra.mxu0 0.0
        %1336 = vmatprep.subr.mxu0 0.0
        %1337 = vmatpush1.msra.mxu0 0.0
        %1338 = vmatprep.subr.mxu0 0.0
        %1339 = vmatpush1.msra.mxu0 0.0
        %1340 = vmatprep.subr.mxu0 0.0
        %1341 = vmatpush1.msra.mxu0 0.0
        %1342 = vmatprep.subr.mxu0 0.0
        %1343 = vmatpush1.msra.mxu0 0.0
        %1344 = vmatprep.subr.mxu0 0.0
        %1345 = vmatpush1.msra.mxu0 0.0
        %1346 = vmatprep.subr.mxu0 0.0
        %1347 = vmatpush1.msra.mxu0 0.0
        %1348 = vmatprep.subr.mxu0 0.0
        %1349 = vmatpush1.msra.mxu0 0.0
        %1350 = vmatprep.subr.mxu0 0.0
        %1351 = vmatpush1.msra.mxu0 0.0
        %1352 = vmatprep.subr.mxu0 0.0
        %1353 = vmatpush1.msra.mxu0 0.0
        %1354 = vmatprep.subr.mxu0 0.0
        %1355 = vmatpush1.msra.mxu0 0.0
        %1356 = vmatprep.mubr.f32.mxu0 0.0
        %1357 = vmatmul.mubr.f32.gmra.mrb[0].mxu0 %v1269
        %v1358 = vpop.f32.mrb[0].mxu0
        %v1359 = vadd.f32 %v1290, %v1358
        %v1360 = vpop.f32.mrb[0].mxu0
        %1361 = vdwg.mxu0
        %v1362 = vmul.f32 %v1359, %v1359
        %v1363 = vmul.f32 %v1359, %v1362
        %v1364 = vmul.f32 %v1363, 0.044715
        %v1365 = vadd.f32 %v1359, %v1364
        %v1366 = vmul.f32 %v1365, 0.7978846
        %v1367 = vtanh.pop %v1366
        %v1368 = vadd.f32 %v1367, 1.0
        %v1369 = vmul.f32 %v1368, 0.5
        %v1370 = vmul.f32 %v1359, %v1369
        %v1371 = vld [vmem:[%s8] sm:$0xff]
        %v1372 = vld [vmem:[%s8 + $0x8] sm:$0xff]
        %v1373 = vld [vmem:[%s8 + $0x10] sm:$0xff]
        %v1374 = vld [vmem:[%s8 + $0x18] sm:$0xff]
        %v1375 = vld [vmem:[%s8 + $0x20] sm:$0xff]
        %v1376 = vld [vmem:[%s8 + $0x28] sm:$0xff]
        %v1377 = vld [vmem:[%s8 + $0x30] sm:$0xff]
        %v1378 = vld [vmem:[%s8 + $0x38] sm:$0xff]
        %v1380 = vlaneseq
        %v1381 = vshrl.u32 %v1380, 7
        %v1382 = vsub.s32 0, %v1381
        %v1383 = vrot.slane %v359, %v1382
        %vm1385 = vcmask 523264
        %v1387 = vsel %vm1385, %v1370, 0
        %1389 = vmatprep.subr.mxu0 0.0
        %1390 = vmatpush1.msra.mxu0 %v1371
        %1391 = vmatprep.subr.mxu0 0.0
        %1392 = vmatpush1.msra.mxu0 %v1372
        %1393 = vmatprep.subr.mxu0 0.0
        %1394 = vmatpush1.msra.mxu0 %v1373
        %1395 = vmatprep.subr.mxu0 0.0
        %1396 = vmatpush1.msra.mxu0 %v1374
        %1397 = vmatprep.subr.mxu0 0.0
        %1398 = vmatpush1.msra.mxu0 %v1375
        %1399 = vmatprep.subr.mxu0 0.0
        %1400 = vmatpush1.msra.mxu0 %v1376
        %1401 = vmatprep.subr.mxu0 0.0
        %1402 = vmatpush1.msra.mxu0 %v1377
        %1403 = vmatprep.subr.mxu0 0.0
        %1404 = vmatpush1.msra.mxu0 %v1378
        %1405 = vmatprep.subr.mxu0 0.0
        %1406 = vmatpush1.msra.mxu0 0.0
        %1407 = vmatprep.subr.mxu0 0.0
        %1408 = vmatpush1.msra.mxu0 0.0
        %1409 = vmatprep.subr.mxu0 0.0
        %1410 = vmatpush1.msra.mxu0 0.0
        %1411 = vmatprep.subr.mxu0 0.0
        %1412 = vmatpush1.msra.mxu0 0.0
        %1413 = vmatprep.subr.mxu0 0.0
        %1414 = vmatpush1.msra.mxu0 0.0
        %1415 = vmatprep.subr.mxu0 0.0
        %1416 = vmatpush1.msra.mxu0 0.0
        %1417 = vmatprep.subr.mxu0 0.0
        %1418 = vmatpush1.msra.mxu0 0.0
        %1419 = vmatprep.subr.mxu0 0.0
        %1420 = vmatpush1.msra.mxu0 0.0
        %1421 = vmatprep.subr.mxu0 0.0
        %1422 = vmatpush1.msra.mxu0 0.0
        %1423 = vmatprep.subr.mxu0 0.0
        %1424 = vmatpush1.msra.mxu0 0.0
        %1425 = vmatprep.subr.mxu0 0.0
        %1426 = vmatpush1.msra.mxu0 0.0
        %1427 = vmatprep.subr.mxu0 0.0
        %1428 = vmatpush1.msra.mxu0 0.0
        %1429 = vmatprep.subr.mxu0 0.0
        %1430 = vmatpush1.msra.mxu0 0.0
        %1431 = vmatprep.subr.mxu0 0.0
        %1432 = vmatpush1.msra.mxu0 0.0
        %1433 = vmatprep.subr.mxu0 0.0
        %1434 = vmatpush1.msra.mxu0 0.0
        %1435 = vmatprep.subr.mxu0 0.0
        %1436 = vmatpush1.msra.mxu0 0.0
        %1437 = vmatprep.subr.mxu0 0.0
        %1438 = vmatpush1.msra.mxu0 0.0
        %1439 = vmatprep.subr.mxu0 0.0
        %1440 = vmatpush1.msra.mxu0 0.0
        %1441 = vmatprep.subr.mxu0 0.0
        %1442 = vmatpush1.msra.mxu0 0.0
        %1443 = vmatprep.subr.mxu0 0.0
        %1444 = vmatpush1.msra.mxu0 0.0
        %1445 = vmatprep.subr.mxu0 0.0
        %1446 = vmatpush1.msra.mxu0 0.0
        %1447 = vmatprep.subr.mxu0 0.0
        %1448 = vmatpush1.msra.mxu0 0.0
        %1449 = vmatprep.subr.mxu0 0.0
        %1450 = vmatpush1.msra.mxu0 0.0
        %1451 = vmatprep.subr.mxu0 0.0
        %1452 = vmatpush1.msra.mxu0 0.0
        %1453 = vmatprep.mubr.f32.mxu0 0.0
        %1454 = vmatmul.mubr.f32.gmra.mrb[0].mxu0 %v1387
        %v1455 = vpop.f32.mrb[0].mxu0
        %v1456 = vadd.f32 %v1383, %v1455
        %v1457 = vpop.f32.mrb[0].mxu0
        %1458 = vdwg.mxu0
        %v1459 = vadd.f32 %v1456, %v1255
        %1460 = vadd.xlane.f32.xlu0 %v1459
        %v1461 = vpop.xlane.xlu0 %1460
        %v1462 = vmul.f32 %v1461, 0.03125
        %v1463 = vmul.f32 %v1459, %v1459
        %1464 = vadd.xlane.f32.xlu0 %v1463
        %v1465 = vpop.xlane.xlu0 %1464
        %v1466 = vmul.f32 %v1465, 0.03125
        %v1467 = vmul.f32 %v1462, %v1462
        %v1468 = vsub.f32 %v1466, %v1467
        %v1469 = vmax.f32 %v1468, 0.0
        %v1470 = vsub.f32 %v1459, %v1462
        %v1471 = vadd.f32 %v1469, 1e-05
        %v1472 = vrsqrt.pop %v1471
        %v1473 = vmul.f32 %v1470, %v1472
        %v1474 = vlaneseq
        %v1475 = vshrl.u32 %v1474, 7
        %v1476 = vsub.s32 0, %v1475
        %v1477 = vrot.slane %v362, %v1476
        %v1478 = vmul.f32 %v1473, %v1477
        %v1479 = vlaneseq
        %v1480 = vshrl.u32 %v1479, 7
        %v1481 = vsub.s32 0, %v1480
        %v1482 = vrot.slane %v363, %v1481
        %v1483 = vadd.f32 %v1478, %v1482
        %1484 = vst [vmem:[%s350] sm:$0xff] %v1483
        %s1485 = sand.u32 %s247, 1
        %s1486 = scalar_lea.sflag [#allocation3], %s1485
        %s1487 = sand.u32 %s247, 1
        %s1488 = smul.addr %s1487, 8
        %s1489 = scalar_lea.vmem [#allocation2], %s1488
        // Predicated region
        $region61: #{tpu_custom_call.1} parent=59 // pred_check
          %p1490 = pneg %p257
        $region62: #{tpu_custom_call.1} parent=59 // pred_check_branch
          %1492 = sbr.rel (%p1490) target = $region64
        $region63: #{tpu_custom_call.1} parent=59 // pred_region
          %s1494 = ssub.s32 128, 128
          %1495 = vsyncadd %s1486, %s1494
          %s1496 = smul.addr %s24, 128
          %s1497 = scalar_lea.hbm %s10, %s1496
          %s1499 = sshll.u32 %s1489, 4
          %s1500 = int_to_ptr.vmem [resolvable:$true] %s1499
          %1502 = dma.vmem_to_hbm [thread:$0]  %s1500, 128, %s1497, %s1486
        $region64: #{tpu_custom_call.1} parent=59 // pred_fallthru
          _
      $region60: #{tpu_custom_call.1} parent=5 // pred_fallthru
        _
      %p1503 = scmp.le.s32.totalorder 2, %s19
      // Predicated region
      $region65: #{tpu_custom_call.1} parent=5 // pred_check
        %p1504 = pneg %p1503
      $region66: #{tpu_custom_call.1} parent=5 // pred_check_branch
        %1506 = sbr.rel (%p1504) target = $region68
      $region67: #{tpu_custom_call.1} parent=5 // pred_region
        %s1507 = ssub.s32 %s19, 2
        // Predicated region
        $region69: #{tpu_custom_call.1} parent=67 // pred_check
          %p1508 = pneg %p263
        $region70: #{tpu_custom_call.1} parent=67 // pred_check_branch
          %1510 = sbr.rel (%p1508) target = $region72
        $region71: #{tpu_custom_call.1} parent=67 // pred_region
          %s1511 = sand.u32 %s248, 1
          %s1512 = scalar_lea.sflag [#allocation3], %s1511
          %s1513 = sand.u32 %s248, 1
          %s1514 = smul.addr %s1513, 8
          %s1515 = scalar_lea.vmem [#allocation2], %s1514
          %1516 = dma.done %s1512, 128
        $region72: #{tpu_custom_call.1} parent=67 // pred_fallthru
          _
      $region68: #{tpu_custom_call.1} parent=5 // pred_fallthru
        _
    $region6: #{tpu_custom_call.1} parent=1 // loop_footer
      %s23 = sadd.s32 1, %s19
    $region7: #{tpu_custom_call.1} parent=1 // loop_footer_branch
      %18 = sbr.rel target = $region3
    $region8: #{tpu_custom_call.1} parent=1 // loop_exit
      _
    %1517 = vsyncpa [#allocation3], 1
    %s1518 = scalar_lea.sflag [#allocation3], 1
    %1519 = vsyncpa %s1518, 1

</llo_original>
